<compile_context>
chip_gen: v7x
topology: tpu7x:2x2x1
jax: 0.10.0
libtpu: 0.0.40
codegen_flags: <defaults>
</compile_context>

<pallas_src>
import jax
import jax.numpy as jnp
import numpy as np
from jax.experimental import pallas as pl
from jax.experimental.pallas import tpu as pltpu

_BN_EPS = 1e-5
_PER_TAP_MIN_CHANNELS = 128   # use per-tap accumulation when the conv's Cin_p >= this


def _round_up(x, m):
    return -(-x // m) * m


def _fold_bn(gamma, beta, mean, var, eps=_BN_EPS):
    s = gamma / jnp.sqrt(var + eps)
    return s.astype(jnp.float32), (beta - mean * s).astype(jnp.float32)


def _prep_conv3x3(w_hwio, scale, cin_p, cout_p, per_tap):
    """(3,3,Cin,Cout) HWIO weight with BN scale folded.

    per_tap=True  -> (9, Cout_p, Cin_p) bf16 (one lane-aligned slab per tap)
    per_tap=False -> (Cout_p, 9*Cin_p)  bf16 (single big-K matmul)
    """
    kh, kw, cin, cout = w_hwio.shape
    w = w_hwio.astype(jnp.float32) * scale[None, None, None, :]
    w = jnp.pad(w, ((0, 0), (0, 0), (0, cin_p - cin), (0, cout_p - cout)))
    if per_tap:
        w = jnp.transpose(w, (0, 1, 3, 2)).reshape(kh * kw, cout_p, cin_p)
    else:
        w = jnp.transpose(w, (3, 0, 1, 2)).reshape(cout_p, kh * kw * cin_p)
    return w.astype(jnp.bfloat16)


def _prep_conv1x1(w_io, scale, cin_p, cout_p):
    """(Cin,Cout) weight, optional BN scale folded -> (Cout_p, Cin_p) bf16."""
    cin, cout = w_io.shape
    w = w_io.astype(jnp.float32)
    if scale is not None:
        w = w * scale[None, :]
    w = jnp.pad(w, ((0, cin_p - cin), (0, cout_p - cout)))
    return jnp.transpose(w, (1, 0)).astype(jnp.bfloat16)


def _make_kernel(H, W, Cp, Cmp, has_downsample, per_tap1, per_tap2):
    HW = H * W
    halo = _round_up(W + 1, 128)          # lane-aligned zero halo (>= W+1)
    taps = [(ky - 1, kx - 1) for ky in range(3) for kx in range(3)]

    def conv3x3(a, w_ref, cin_p, left_m, right_m, per_tap):
        """a: (cin_p, HW) bf16 -> (cout_p, HW) f32, 3x3 SAME zero-pad conv."""
        zeros = jnp.zeros((cin_p, halo), jnp.bfloat16)
        # Lane-aligned concat: the zero halo supplies the vertical OOB taps;
        # only the horizontal row-wrap needs masking (corners covered too).
        a_pad = jnp.concatenate([zeros, a, zeros], axis=1)   # (C, HW + 2*halo)

        def tap_slab(t):
            oy, ox = taps[t]
            s = oy * W + ox
            sh = a_pad[:, halo + s: halo + s + HW]
            # (1, HW) wrap masks; implicit sublane broadcast in the multiply.
            if ox == 1:
                sh = sh * right_m
            elif ox == -1:
                sh = sh * left_m
            return sh

        if per_tap:
            # 9 accumulated dots (K = cin_p each); no (9*C, HW) patch matrix.
            acc = jnp.dot(w_ref[0], tap_slab(0), preferred_element_type=jnp.float32)
            for t in range(1, 9):
                acc = acc + jnp.dot(w_ref[t], tap_slab(t),
                                    preferred_element_type=jnp.float32)
            return acc
        # Small-C path: one big-K dot over the concatenated patch matrix.
        patches = jnp.concatenate([tap_slab(t) for t in range(9)], axis=0)
        return jnp.dot(w_ref[...], patches, preferred_element_type=jnp.float32)

    def kernel(*refs):
        out_ref = refs[-1]
        if has_downsample:
            x_ref, hmask_ref, w1_ref, w2_ref, wd_ref, wout_ref, b_ref = refs[:-1]
        else:
            x_ref, hmask_ref, w1_ref, w2_ref, wout_ref, b_ref = refs[:-1]

        x = x_ref[0]                                   # (Cp, HW) bf16
        b = b_ref[...]                                 # (Cmp, 2|3) f32
        left_m = hmask_ref[0:1, :]                     # (1, HW) bf16: 1.0 where w >= 1
        right_m = hmask_ref[1:2, :]                    # (1, HW) bf16: 1.0 where w <= W-2

        # conv1 (3x3, bn1 scale folded into weights) -> bias -> relu
        h1 = conv3x3(x, w1_ref, Cp, left_m, right_m, per_tap1)      # (Cmp, HW) f32
        h1 = jnp.maximum(h1 + b[:, 0:1], 0.0)

        # conv2 (3x3, bn2 scale folded) -> bias (relu comes after the add)
        res = conv3x3(h1.astype(jnp.bfloat16), w2_ref, Cmp, left_m, right_m, per_tap2)
        res = res + b[:, 1:2]

        # shortcut: 1x1 conv + bn (folded) when in_chan != mid_chan, else identity
        if has_downsample:
            sc = jnp.dot(wd_ref[...], x, preferred_element_type=jnp.float32) + b[:, 2:3]
        else:
            sc = x.astype(jnp.float32)   # Cin == Cmid => Cp == Cmp (asserted in wrapper)

        out = jnp.maximum(sc + res, 0.0)                            # (Cmp, HW)

        # conv_out: 1x1 conv == channel matmul; lane-dense full-tile store.
        y = jnp.dot(wout_ref[...], out.astype(jnp.bfloat16),
                    preferred_element_type=jnp.float32)             # (Nclsp, HW)
        out_ref[0] = y.astype(out_ref.dtype)

    return kernel


def _vmem_limit_bytes(Cp, Cmp, Nclsp, HW, W, has_downsample, per_tap1, per_tap2):
    """Derive a VMEM limit from the actual block/temporary sizes, capped per chip."""
    halo = _round_up(W + 1, 128)
    bf16, f32 = 2, 4
    # per-image pipelined blocks (double-buffered)
    blocks = 2 * Cp * HW * bf16 + 2 * Nclsp * HW * f32
    # grid-invariant operands (assume worst case: a second buffered copy)
    wbytes = (9 * Cmp * Cp + 9 * Cmp * Cmp + Nclsp * Cmp) * bf16
    if has_downsample:
        wbytes += Cmp * Cp * bf16
    wbytes += 2 * HW * bf16 + Cmp * 128 * f32
    blocks += 2 * wbytes
    # in-kernel temporaries: a_pad for both convs, h1/res/out/y, patch matrices
    tmp = (Cp + Cmp) * (HW + 2 * halo) * bf16
    tmp += 3 * Cmp * HW * f32 + Nclsp * HW * f32
    if not per_tap1:
        tmp += 9 * Cp * HW * bf16
    if not per_tap2:
        tmp += 9 * Cmp * HW * bf16
    est = int((blocks + tmp) * 1.5) + (4 << 20)

    cap = 100 << 20                    # v5e / v6e: 128 MiB physical VMEM
    try:
        if "7" in jax.devices()[0].device_kind:
            cap = 48 << 20             # v7x: 64 MiB physical per TensorCore
    except Exception:
        cap = 64 << 20
    return max(32 << 20, min(est, cap))


def resnet_output_forward(x_nchw, params, *,
                          per_tap_min_channels=_PER_TAP_MIN_CHANNELS):
    """x_nchw: (N, Cin, H, W).  Returns (N, n_classes, H, W) float32."""
    N, Cin, H, W = x_nchw.shape
    HW = H * W
    Cmid = params["w1"].shape[-1]
    Ncls = params["wout"].shape[-1]
    has_downsample = params["wd"] is not None
    if not has_downsample:
        assert Cin == Cmid, "identity shortcut requires in_chan == mid_chan"

    # bf16 operands pack 16 rows per sublane tile; f32 output rows pad to 8.
    Cp = _round_up(Cin, 16)
    Cmp = _round_up(Cmid, 16)
    Nclsp = _round_up(Ncls, 8)

    per_tap1 = Cp >= per_tap_min_channels
    per_tap2 = Cmp >= per_tap_min_channels

    # NCHW -> (N, C, H*W): contiguous reshape; bf16 in HBM halves input DMA bytes.
    x = x_nchw.reshape(N, Cin, HW).astype(jnp.bfloat16)
    if Cp != Cin:
        x = jnp.pad(x, ((0, 0), (0, Cp - Cin), (0, 0)))

    s1, b1 = _fold_bn(*params["bn1"])
    s2, b2 = _fold_bn(*params["bn2"])
    w1m = _prep_conv3x3(params["w1"], s1, Cp, Cmp, per_tap1)
    w2m = _prep_conv3x3(params["w2"], s2, Cmp, Cmp, per_tap2)
    woutm = _prep_conv1x1(params["wout"], None, Cmp, Nclsp)   # (Nclsp, Cmp)

    biases = [jnp.pad(b1, (0, Cmp - Cmid)), jnp.pad(b2, (0, Cmp - Cmid))]
    const_args = [w1m, w2m]
    if has_downsample:
        sd, bd = _fold_bn(*params["bnd"])
        const_args.append(_prep_conv1x1(params["wd"], sd, Cp, Cmp))  # (Cmp, Cp)
        biases.append(jnp.pad(bd, (0, Cmp - Cmid)))
    const_args.append(woutm)
    const_args.append(jnp.stack(biases, axis=1))              # (Cmp, 2|3) f32

    # Row-wrap masks: row 0 -> (w >= 1), row 1 -> (w <= W-2).
    col = np.arange(HW, dtype=np.int64) % W
    hmask = jnp.asarray(
        np.stack([(col >= 1), (col <= W - 2)]).astype(np.float32)).astype(jnp.bfloat16)

    kernel = _make_kernel(H, W, Cp, Cmp, has_downsample, per_tap1, per_tap2)
    vmem_limit = _vmem_limit_bytes(Cp, Cmp, Nclsp, HW, W, has_downsample,
                                   per_tap1, per_tap2)

    def run(single_buffer_invariants):
        def const_spec(shape):
            zero = (0,) * len(shape)
            kw = {}
            if single_buffer_invariants:
                kw["pipeline_mode"] = pl.Buffered(1)   # grid-invariant: no 2nd copy
            return pl.BlockSpec(shape, lambda n: zero, **kw)

        in_specs = [pl.BlockSpec((1, Cp, HW), lambda n: (n, 0, 0)),
                    const_spec((2, HW))]
        in_specs += [const_spec(a.shape) for a in const_args]

        return pl.pallas_call(
            kernel,
            out_shape=jax.ShapeDtypeStruct((N, Nclsp, HW), jnp.float32),
            grid=(N,),
            in_specs=in_specs,
            out_specs=pl.BlockSpec((1, Nclsp, HW), lambda n: (n, 0, 0)),
            compiler_params=pltpu.CompilerParams(
                dimension_semantics=("parallel",),
                vmem_limit_bytes=vmem_limit),
        )(x, hmask, *const_args)

    try:
        out_flat = run(True)
    except Exception:
        # Fallback if pipeline_mode=pl.Buffered(1) is unsupported by this jax.
        out_flat = run(False)

    # (N, Nclsp, H*W) -> NCHW, dropping padded output channels.
    return out_flat.reshape(N, Nclsp, H, W)[:, :Ncls]


# ---------------- deterministic param init (kaiming_normal_, a=1) ----------
def init_params(key, in_chan, mid_chan, n_classes):
    k1, k2, k3, k4 = jax.random.split(key, 4)

    def kaiming(k, shape, fan_in):
        # gain for leaky_relu(a=1) = sqrt(2/(1+1^2)) = 1 -> std = 1/sqrt(fan_in)
        return jax.random.normal(k, shape, jnp.float32) / jnp.sqrt(float(fan_in))

    def fresh_bn(c):
        return (jnp.ones((c,), jnp.float32), jnp.zeros((c,), jnp.float32),
                jnp.zeros((c,), jnp.float32), jnp.ones((c,), jnp.float32))

    params = {
        "w1": kaiming(k1, (3, 3, in_chan, mid_chan), 9 * in_chan),
        "bn1": fresh_bn(mid_chan),
        "w2": kaiming(k2, (3, 3, mid_chan, mid_chan), 9 * mid_chan),
        "bn2": fresh_bn(mid_chan),
        "wout": kaiming(k4, (mid_chan, n_classes), mid_chan),
    }
    if in_chan != mid_chan:
        params["wd"] = kaiming(k3, (in_chan, mid_chan), in_chan)
        params["bnd"] = fresh_bn(mid_chan)
    else:
        params["wd"] = None
        params["bnd"] = None
    return params


# ---------------- pure-JAX reference for correctness check -----------------
def ref_forward(x_nchw, params, compute_dtype=jnp.float32):
    """Reference.  compute_dtype=bfloat16 mirrors the kernel's bf16 MXU inputs
    (incl. the bf16 input layout in HBM); float32 is the exact module math."""
    x = jnp.transpose(x_nchw, (0, 2, 3, 1)).astype(jnp.float32)
    if compute_dtype == jnp.bfloat16:
        x = x.astype(jnp.bfloat16).astype(jnp.float32)

    def conv(v, w):
        return jax.lax.conv_general_dilated(
            v.astype(compute_dtype), w.astype(compute_dtype), (1, 1), "SAME",
            dimension_numbers=("NHWC", "HWIO", "NHWC"),
            preferred_element_type=jnp.float32,
            precision=jax.lax.Precision.HIGHEST)

    s1, b1 = _fold_bn(*params["bn1"])
    s2, b2 = _fold_bn(*params["bn2"])

    r = jax.nn.relu(conv(x, params["w1"] * s1[None, None, None, :]) + b1)
    r = conv(r, params["w2"] * s2[None, None, None, :]) + b2
    sc = x
    if params["wd"] is not None:
        sd, bd = _fold_bn(*params["bnd"])
        wdf = (params["wd"] * sd[None, :]).reshape(1, 1, *params["wd"].shape)
        sc = conv(x, wdf) + bd
    out = jax.nn.relu(sc + r)
    wout = params["wout"].reshape(1, 1, *params["wout"].shape)
    out = conv(out, wout)
    return jnp.transpose(out, (0, 3, 1, 2))


if __name__ == "__main__":
    key = jax.random.PRNGKey(0)
    kx, kp, kx2, kp2 = jax.random.split(key, 4)

    # Config A: downsample shortcut (in_chan != mid_chan); exercise BOTH im2col paths.
    N, in_chan, mid_chan, n_classes, H, W = 2, 4, 8, 6, 16, 16
    x = jax.random.normal(kx, (N, in_chan, H, W), jnp.float32)
    params = init_params(kp, in_chan, mid_chan, n_classes)

    out_concat = jax.block_until_ready(resnet_output_forward(x, params))
    out_pertap = jax.block_until_ready(
        resnet_output_forward(x, params, per_tap_min_channels=1))
    assert out_concat.shape == (N, n_classes, H, W), out_concat.shape
    assert out_pertap.shape == (N, n_classes, H, W), out_pertap.shape

    ref_bf16 = jax.block_until_ready(ref_forward(x, params, jnp.bfloat16))
    ref_f32 = jax.block_until_ready(ref_forward(x, params, jnp.float32))
    for o, name in ((out_concat, "concat"), (out_pertap, "per-tap")):
        err = float(jnp.max(jnp.abs(o - ref_bf16)))
        assert err < 2e-2, f"[{name}] max abs diff vs bf16 reference: {err}"
        err32 = float(jnp.max(jnp.abs(o - ref_f32)))
        assert err32 < 1e-1, f"[{name}] max abs diff vs f32 reference: {err32}"

    # Config B: identity shortcut (in_chan == mid_chan), non-square image, odd n_classes.
    N2, c2, ncls2, H2, W2 = 1, 8, 5, 12, 20
    x2 = jax.random.normal(kx2, (N2, c2, H2, W2), jnp.float32)
    params2 = init_params(kp2, c2, c2, ncls2)
    out2 = jax.block_until_ready(resnet_output_forward(x2, params2))
    assert out2.shape == (N2, ncls2, H2, W2), out2.shape
    err2 = float(jnp.max(jnp.abs(out2 - ref_forward(x2, params2, jnp.bfloat16))))
    assert err2 < 2e-2, f"[identity] max abs diff vs bf16 reference: {err2}"

    print("KERNEL_OK")
</pallas_src>

<mosaic_0001>
module attributes {stable_mosaic.version = 11 : i64} {
  func.func @kernel(%arg0: i32, %arg1: memref<1x16x256xbf16, #tpu.memory_space<vmem>>, %arg2: memref<2x256xbf16, #tpu.memory_space<vmem>>, %arg3: memref<16x144xbf16, #tpu.memory_space<vmem>>, %arg4: memref<16x144xbf16, #tpu.memory_space<vmem>>, %arg5: memref<16x16xbf16, #tpu.memory_space<vmem>>, %arg6: memref<8x16xbf16, #tpu.memory_space<vmem>>, %arg7: memref<16x3xf32, #tpu.memory_space<vmem>>, %arg8: memref<1x8x256xf32, #tpu.memory_space<vmem>>) attributes {dimension_semantics = [#tpu.dimension_semantics<parallel>], iteration_bounds = array<i64: 2>, scalar_prefetch = 0 : i64, scratch_operands = 0 : i64, tpu.core_type = #tpu.core_type<tc>, window_params = [{transform_indices = @transform_0, window_bounds = array<i64: 1, 16, 256>}, {pipeline_mode = #tpu.pipeline_mode<synchronous>, transform_indices = @transform_1, window_bounds = array<i64: 2, 256>}, {pipeline_mode = #tpu.pipeline_mode<synchronous>, transform_indices = @transform_2, window_bounds = array<i64: 16, 144>}, {pipeline_mode = #tpu.pipeline_mode<synchronous>, transform_indices = @transform_3, window_bounds = array<i64: 16, 144>}, {pipeline_mode = #tpu.pipeline_mode<synchronous>, transform_indices = @transform_4, window_bounds = array<i64: 16, 16>}, {pipeline_mode = #tpu.pipeline_mode<synchronous>, transform_indices = @transform_5, window_bounds = array<i64: 8, 16>}, {pipeline_mode = #tpu.pipeline_mode<synchronous>, transform_indices = @transform_6, window_bounds = array<i64: 16, 3>}, {transform_indices = @transform_7, window_bounds = array<i64: 1, 8, 256>}]} {
    %c0 = arith.constant 0 : index
    %c0_0 = arith.constant 0 : index
    %c0_1 = arith.constant 0 : index
    %0 = vector.load %arg1[%c0, %c0_0, %c0_1] : memref<1x16x256xbf16, #tpu.memory_space<vmem>>, vector<1x16x256xbf16>
    %1 = vector.shape_cast %0 : vector<1x16x256xbf16> to vector<16x256xbf16>
    %c0_2 = arith.constant 0 : index
    %c0_3 = arith.constant 0 : index
    %2 = vector.load %arg7[%c0_2, %c0_3] : memref<16x3xf32, #tpu.memory_space<vmem>>, vector<16x3xf32>
    %c0_4 = arith.constant 0 : index
    %c0_5 = arith.constant 0 : index
    %3 = vector.load %arg2[%c0_4, %c0_5] : memref<2x256xbf16, #tpu.memory_space<vmem>>, vector<1x256xbf16>
    %c1 = arith.constant 1 : index
    %c0_6 = arith.constant 0 : index
    %4 = vector.load %arg2[%c1, %c0_6] : memref<2x256xbf16, #tpu.memory_space<vmem>>, vector<1x256xbf16>
    %cst = arith.constant 0.000000e+00 : bf16
    %5 = vector.broadcast %cst : bf16 to vector<16x128xbf16>
    %6 = tpu.concatenate %5, %1, %5 in 1 : vector<16x128xbf16>, vector<16x256xbf16>, vector<16x128xbf16> -> vector<16x512xbf16>
    %7 = vector.extract_strided_slice %6 {offsets = [0, 111], sizes = [16, 256], strides = [1, 1]} : vector<16x512xbf16> to vector<16x256xbf16>
    %8 = vector.broadcast %3 : vector<1x256xbf16> to vector<16x256xbf16>
    %9 = arith.mulf %7, %8 : vector<16x256xbf16>
    %10 = vector.extract_strided_slice %6 {offsets = [0, 112], sizes = [16, 256], strides = [1, 1]} : vector<16x512xbf16> to vector<16x256xbf16>
    %11 = vector.extract_strided_slice %6 {offsets = [0, 113], sizes = [16, 256], strides = [1, 1]} : vector<16x512xbf16> to vector<16x256xbf16>
    %12 = vector.broadcast %4 : vector<1x256xbf16> to vector<16x256xbf16>
    %13 = arith.mulf %11, %12 : vector<16x256xbf16>
    %14 = vector.extract_strided_slice %6 {offsets = [0, 127], sizes = [16, 256], strides = [1, 1]} : vector<16x512xbf16> to vector<16x256xbf16>
    %15 = vector.broadcast %3 : vector<1x256xbf16> to vector<16x256xbf16>
    %16 = arith.mulf %14, %15 : vector<16x256xbf16>
    %17 = vector.extract_strided_slice %6 {offsets = [0, 128], sizes = [16, 256], strides = [1, 1]} : vector<16x512xbf16> to vector<16x256xbf16>
    %18 = vector.extract_strided_slice %6 {offsets = [0, 129], sizes = [16, 256], strides = [1, 1]} : vector<16x512xbf16> to vector<16x256xbf16>
    %19 = vector.broadcast %4 : vector<1x256xbf16> to vector<16x256xbf16>
    %20 = arith.mulf %18, %19 : vector<16x256xbf16>
    %21 = vector.extract_strided_slice %6 {offsets = [0, 143], sizes = [16, 256], strides = [1, 1]} : vector<16x512xbf16> to vector<16x256xbf16>
    %22 = vector.broadcast %3 : vector<1x256xbf16> to vector<16x256xbf16>
    %23 = arith.mulf %21, %22 : vector<16x256xbf16>
    %24 = vector.extract_strided_slice %6 {offsets = [0, 144], sizes = [16, 256], strides = [1, 1]} : vector<16x512xbf16> to vector<16x256xbf16>
    %25 = vector.extract_strided_slice %6 {offsets = [0, 145], sizes = [16, 256], strides = [1, 1]} : vector<16x512xbf16> to vector<16x256xbf16>
    %26 = vector.broadcast %4 : vector<1x256xbf16> to vector<16x256xbf16>
    %27 = arith.mulf %25, %26 : vector<16x256xbf16>
    %28 = tpu.concatenate %9, %10, %13, %16, %17, %20, %23, %24, %27 in 0 : vector<16x256xbf16>, vector<16x256xbf16>, vector<16x256xbf16>, vector<16x256xbf16>, vector<16x256xbf16>, vector<16x256xbf16>, vector<16x256xbf16>, vector<16x256xbf16>, vector<16x256xbf16> -> vector<144x256xbf16>
    %c0_7 = arith.constant 0 : index
    %c0_8 = arith.constant 0 : index
    %29 = vector.load %arg3[%c0_7, %c0_8] : memref<16x144xbf16, #tpu.memory_space<vmem>>, vector<16x144xbf16>
    %cst_9 = arith.constant dense<0.000000e+00> : vector<16x256xf32>
    %30 = tpu.matmul %29, %28, %cst_9 {dimension_numbers = #tpu.dot_dimension_numbers<[1], [0], [0], [1], [0, 0, 1, 1], [], []>} : vector<16x144xbf16>, vector<144x256xbf16>, vector<16x256xf32> -> vector<16x256xf32>
    %31 = vector.extract_strided_slice %2 {offsets = [0, 0], sizes = [16, 1], strides = [1, 1]} : vector<16x3xf32> to vector<16x1xf32>
    %32 = vector.broadcast %31 : vector<16x1xf32> to vector<16x256xf32>
    %33 = arith.addf %30, %32 : vector<16x256xf32>
    %cst_10 = arith.constant 0.000000e+00 : f32
    %34 = vector.broadcast %cst_10 : f32 to vector<16x256xf32>
    %35 = arith.maximumf %33, %34 : vector<16x256xf32>
    %36 = arith.truncf %35 : vector<16x256xf32> to vector<16x256xbf16>
    %cst_11 = arith.constant 0.000000e+00 : bf16
    %37 = vector.broadcast %cst_11 : bf16 to vector<16x128xbf16>
    %38 = tpu.concatenate %37, %36, %37 in 1 : vector<16x128xbf16>, vector<16x256xbf16>, vector<16x128xbf16> -> vector<16x512xbf16>
    %39 = vector.extract_strided_slice %38 {offsets = [0, 111], sizes = [16, 256], strides = [1, 1]} : vector<16x512xbf16> to vector<16x256xbf16>
    %40 = vector.broadcast %3 : vector<1x256xbf16> to vector<16x256xbf16>
    %41 = arith.mulf %39, %40 : vector<16x256xbf16>
    %42 = vector.extract_strided_slice %38 {offsets = [0, 112], sizes = [16, 256], strides = [1, 1]} : vector<16x512xbf16> to vector<16x256xbf16>
    %43 = vector.extract_strided_slice %38 {offsets = [0, 113], sizes = [16, 256], strides = [1, 1]} : vector<16x512xbf16> to vector<16x256xbf16>
    %44 = vector.broadcast %4 : vector<1x256xbf16> to vector<16x256xbf16>
    %45 = arith.mulf %43, %44 : vector<16x256xbf16>
    %46 = vector.extract_strided_slice %38 {offsets = [0, 127], sizes = [16, 256], strides = [1, 1]} : vector<16x512xbf16> to vector<16x256xbf16>
    %47 = vector.broadcast %3 : vector<1x256xbf16> to vector<16x256xbf16>
    %48 = arith.mulf %46, %47 : vector<16x256xbf16>
    %49 = vector.extract_strided_slice %38 {offsets = [0, 128], sizes = [16, 256], strides = [1, 1]} : vector<16x512xbf16> to vector<16x256xbf16>
    %50 = vector.extract_strided_slice %38 {offsets = [0, 129], sizes = [16, 256], strides = [1, 1]} : vector<16x512xbf16> to vector<16x256xbf16>
    %51 = vector.broadcast %4 : vector<1x256xbf16> to vector<16x256xbf16>
    %52 = arith.mulf %50, %51 : vector<16x256xbf16>
    %53 = vector.extract_strided_slice %38 {offsets = [0, 143], sizes = [16, 256], strides = [1, 1]} : vector<16x512xbf16> to vector<16x256xbf16>
    %54 = vector.broadcast %3 : vector<1x256xbf16> to vector<16x256xbf16>
    %55 = arith.mulf %53, %54 : vector<16x256xbf16>
    %56 = vector.extract_strided_slice %38 {offsets = [0, 144], sizes = [16, 256], strides = [1, 1]} : vector<16x512xbf16> to vector<16x256xbf16>
    %57 = vector.extract_strided_slice %38 {offsets = [0, 145], sizes = [16, 256], strides = [1, 1]} : vector<16x512xbf16> to vector<16x256xbf16>
    %58 = vector.broadcast %4 : vector<1x256xbf16> to vector<16x256xbf16>
    %59 = arith.mulf %57, %58 : vector<16x256xbf16>
    %60 = tpu.concatenate %41, %42, %45, %48, %49, %52, %55, %56, %59 in 0 : vector<16x256xbf16>, vector<16x256xbf16>, vector<16x256xbf16>, vector<16x256xbf16>, vector<16x256xbf16>, vector<16x256xbf16>, vector<16x256xbf16>, vector<16x256xbf16>, vector<16x256xbf16> -> vector<144x256xbf16>
    %c0_12 = arith.constant 0 : index
    %c0_13 = arith.constant 0 : index
    %61 = vector.load %arg4[%c0_12, %c0_13] : memref<16x144xbf16, #tpu.memory_space<vmem>>, vector<16x144xbf16>
    %cst_14 = arith.constant dense<0.000000e+00> : vector<16x256xf32>
    %62 = tpu.matmul %61, %60, %cst_14 {dimension_numbers = #tpu.dot_dimension_numbers<[1], [0], [0], [1], [0, 0, 1, 1], [], []>} : vector<16x144xbf16>, vector<144x256xbf16>, vector<16x256xf32> -> vector<16x256xf32>
    %63 = vector.extract_strided_slice %2 {offsets = [0, 1], sizes = [16, 1], strides = [1, 1]} : vector<16x3xf32> to vector<16x1xf32>
    %64 = vector.broadcast %63 : vector<16x1xf32> to vector<16x256xf32>
    %65 = arith.addf %62, %64 : vector<16x256xf32>
    %c0_15 = arith.constant 0 : index
    %c0_16 = arith.constant 0 : index
    %66 = vector.load %arg5[%c0_15, %c0_16] : memref<16x16xbf16, #tpu.memory_space<vmem>>, vector<16x16xbf16>
    %cst_17 = arith.constant dense<0.000000e+00> : vector<16x256xf32>
    %67 = tpu.matmul %66, %1, %cst_17 {dimension_numbers = #tpu.dot_dimension_numbers<[1], [0], [0], [1], [0, 0, 1, 1], [], []>} : vector<16x16xbf16>, vector<16x256xbf16>, vector<16x256xf32> -> vector<16x256xf32>
    %68 = vector.extract_strided_slice %2 {offsets = [0, 2], sizes = [16, 1], strides = [1, 1]} : vector<16x3xf32> to vector<16x1xf32>
    %69 = vector.broadcast %68 : vector<16x1xf32> to vector<16x256xf32>
    %70 = arith.addf %67, %69 : vector<16x256xf32>
    %71 = arith.addf %70, %65 : vector<16x256xf32>
    %cst_18 = arith.constant 0.000000e+00 : f32
    %72 = vector.broadcast %cst_18 : f32 to vector<16x256xf32>
    %73 = arith.maximumf %71, %72 : vector<16x256xf32>
    %c0_19 = arith.constant 0 : index
    %c0_20 = arith.constant 0 : index
    %74 = vector.load %arg6[%c0_19, %c0_20] : memref<8x16xbf16, #tpu.memory_space<vmem>>, vector<8x16xbf16>
    %75 = arith.truncf %73 : vector<16x256xf32> to vector<16x256xbf16>
    %cst_21 = arith.constant dense<0.000000e+00> : vector<8x256xf32>
    %76 = tpu.matmul %74, %75, %cst_21 {dimension_numbers = #tpu.dot_dimension_numbers<[1], [0], [0], [1], [0, 0, 1, 1], [], []>} : vector<8x16xbf16>, vector<16x256xbf16>, vector<8x256xf32> -> vector<8x256xf32>
    %c0_22 = arith.constant 0 : index
    %c0_23 = arith.constant 0 : index
    %c0_24 = arith.constant 0 : index
    %77 = vector.load %arg8[%c0_22, %c0_23, %c0_24] : memref<1x8x256xf32, #tpu.memory_space<vmem>>, vector<1x8x256xf32>
    %78 = vector.shape_cast %77 : vector<1x8x256xf32> to vector<8x256xf32>
    %79 = vector.shape_cast %76 : vector<8x256xf32> to vector<1x8x256xf32>
    tpu.vector_store %arg8[%c0_22, %c0_23, %c0_24], %79 {strides = array<i32>} : memref<1x8x256xf32, #tpu.memory_space<vmem>>, vector<1x8x256xf32>,
    return
  }
  func.func @transform_0(%arg0: i32) -> (i32, i32, i32) {
    %c0_i32 = arith.constant 0 : i32
    %c0_i32_0 = arith.constant 0 : i32
    %c0_i32_1 = arith.constant 0 : i32
    return %arg0, %c0_i32, %c0_i32_0 : i32, i32, i32
  }
  func.func @transform_1(%arg0: i32) -> (i32, i32) {
    %c0_i32 = arith.constant 0 : i32
    %c0_i32_0 = arith.constant 0 : i32
    %c0_i32_1 = arith.constant 0 : i32
    return %c0_i32, %c0_i32_0 : i32, i32
  }
  func.func @transform_2(%arg0: i32) -> (i32, i32) {
    %c0_i32 = arith.constant 0 : i32
    %c0_i32_0 = arith.constant 0 : i32
    %c0_i32_1 = arith.constant 0 : i32
    return %c0_i32, %c0_i32_0 : i32, i32
  }
  func.func @transform_3(%arg0: i32) -> (i32, i32) {
    %c0_i32 = arith.constant 0 : i32
    %c0_i32_0 = arith.constant 0 : i32
    %c0_i32_1 = arith.constant 0 : i32
    return %c0_i32, %c0_i32_0 : i32, i32
  }
  func.func @transform_4(%arg0: i32) -> (i32, i32) {
    %c0_i32 = arith.constant 0 : i32
    %c0_i32_0 = arith.constant 0 : i32
    %c0_i32_1 = arith.constant 0 : i32
    return %c0_i32, %c0_i32_0 : i32, i32
  }
  func.func @transform_5(%arg0: i32) -> (i32, i32) {
    %c0_i32 = arith.constant 0 : i32
    %c0_i32_0 = arith.constant 0 : i32
    %c0_i32_1 = arith.constant 0 : i32
    return %c0_i32, %c0_i32_0 : i32, i32
  }
  func.func @transform_6(%arg0: i32) -> (i32, i32) {
    %c0_i32 = arith.constant 0 : i32
    %c0_i32_0 = arith.constant 0 : i32
    %c0_i32_1 = arith.constant 0 : i32
    return %c0_i32, %c0_i32_0 : i32, i32
  }
  func.func @transform_7(%arg0: i32) -> (i32, i32, i32) {
    %c0_i32 = arith.constant 0 : i32
    %c0_i32_0 = arith.constant 0 : i32
    %c0_i32_1 = arith.constant 0 : i32
    return %arg0, %c0_i32, %c0_i32_0 : i32, i32, i32
  }
}

module attributes {stable_mosaic.version = 11 : i64} {
  func.func @kernel(%arg0: i32, %arg1: memref<1x16x256xbf16, #tpu.memory_space<vmem>>, %arg2: memref<2x256xbf16, #tpu.memory_space<vmem>>, %arg3: memref<16x144xbf16, #tpu.memory_space<vmem>>, %arg4: memref<16x144xbf16, #tpu.memory_space<vmem>>, %arg5: memref<16x16xbf16, #tpu.memory_space<vmem>>, %arg6: memref<8x16xbf16, #tpu.memory_space<vmem>>, %arg7: memref<16x3xf32, #tpu.memory_space<vmem>>, %arg8: memref<1x8x256xf32, #tpu.memory_space<vmem>>) attributes {dimension_semantics = [#tpu.dimension_semantics<parallel>], iteration_bounds = array<i64: 2>, scalar_prefetch = 0 : i64, scratch_operands = 0 : i64, tpu.core_type = #tpu.core_type<tc>, window_params = [{transform_indices = @transform_0, window_bounds = array<i64: 1, 16, 256>}, {pipeline_mode = #tpu.pipeline_mode<synchronous>, transform_indices = @transform_1, window_bounds = array<i64: 2, 256>}, {pipeline_mode = #tpu.pipeline_mode<synchronous>, transform_indices = @transform_2, window_bounds = array<i64: 16, 144>}, {pipeline_mode = #tpu.pipeline_mode<synchronous>, transform_indices = @transform_3, window_bounds = array<i64: 16, 144>}, {pipeline_mode = #tpu.pipeline_mode<synchronous>, transform_indices = @transform_4, window_bounds = array<i64: 16, 16>}, {pipeline_mode = #tpu.pipeline_mode<synchronous>, transform_indices = @transform_5, window_bounds = array<i64: 8, 16>}, {pipeline_mode = #tpu.pipeline_mode<synchronous>, transform_indices = @transform_6, window_bounds = array<i64: 16, 3>}, {transform_indices = @transform_7, window_bounds = array<i64: 1, 8, 256>}]} {
    %c0 = arith.constant 0 : index
    %c0_0 = arith.constant 0 : index
    %c0_1 = arith.constant 0 : index
    %0 = vector.load %arg1[%c0, %c0_0, %c0_1] : memref<1x16x256xbf16, #tpu.memory_space<vmem>>, vector<1x16x256xbf16>
    %1 = vector.shape_cast %0 : vector<1x16x256xbf16> to vector<16x256xbf16>
    %c0_2 = arith.constant 0 : index
    %c0_3 = arith.constant 0 : index
    %2 = vector.load %arg7[%c0_2, %c0_3] : memref<16x3xf32, #tpu.memory_space<vmem>>, vector<16x3xf32>
    %c0_4 = arith.constant 0 : index
    %c0_5 = arith.constant 0 : index
    %3 = vector.load %arg2[%c0_4, %c0_5] : memref<2x256xbf16, #tpu.memory_space<vmem>>, vector<1x256xbf16>
    %c1 = arith.constant 1 : index
    %c0_6 = arith.constant 0 : index
    %4 = vector.load %arg2[%c1, %c0_6] : memref<2x256xbf16, #tpu.memory_space<vmem>>, vector<1x256xbf16>
    %cst = arith.constant 0.000000e+00 : bf16
    %5 = vector.broadcast %cst : bf16 to vector<16x128xbf16>
    %6 = tpu.concatenate %5, %1, %5 in 1 : vector<16x128xbf16>, vector<16x256xbf16>, vector<16x128xbf16> -> vector<16x512xbf16>
    %7 = vector.extract_strided_slice %6 {offsets = [0, 111], sizes = [16, 256], strides = [1, 1]} : vector<16x512xbf16> to vector<16x256xbf16>
    %8 = vector.broadcast %3 : vector<1x256xbf16> to vector<16x256xbf16>
    %9 = arith.mulf %7, %8 : vector<16x256xbf16>
    %10 = vector.extract_strided_slice %6 {offsets = [0, 112], sizes = [16, 256], strides = [1, 1]} : vector<16x512xbf16> to vector<16x256xbf16>
    %11 = vector.extract_strided_slice %6 {offsets = [0, 113], sizes = [16, 256], strides = [1, 1]} : vector<16x512xbf16> to vector<16x256xbf16>
    %12 = vector.broadcast %4 : vector<1x256xbf16> to vector<16x256xbf16>
    %13 = arith.mulf %11, %12 : vector<16x256xbf16>
    %14 = vector.extract_strided_slice %6 {offsets = [0, 127], sizes = [16, 256], strides = [1, 1]} : vector<16x512xbf16> to vector<16x256xbf16>
    %15 = vector.broadcast %3 : vector<1x256xbf16> to vector<16x256xbf16>
    %16 = arith.mulf %14, %15 : vector<16x256xbf16>
    %17 = vector.extract_strided_slice %6 {offsets = [0, 128], sizes = [16, 256], strides = [1, 1]} : vector<16x512xbf16> to vector<16x256xbf16>
    %18 = vector.extract_strided_slice %6 {offsets = [0, 129], sizes = [16, 256], strides = [1, 1]} : vector<16x512xbf16> to vector<16x256xbf16>
    %19 = vector.broadcast %4 : vector<1x256xbf16> to vector<16x256xbf16>
    %20 = arith.mulf %18, %19 : vector<16x256xbf16>
    %21 = vector.extract_strided_slice %6 {offsets = [0, 143], sizes = [16, 256], strides = [1, 1]} : vector<16x512xbf16> to vector<16x256xbf16>
    %22 = vector.broadcast %3 : vector<1x256xbf16> to vector<16x256xbf16>
    %23 = arith.mulf %21, %22 : vector<16x256xbf16>
    %24 = vector.extract_strided_slice %6 {offsets = [0, 144], sizes = [16, 256], strides = [1, 1]} : vector<16x512xbf16> to vector<16x256xbf16>
    %25 = vector.extract_strided_slice %6 {offsets = [0, 145], sizes = [16, 256], strides = [1, 1]} : vector<16x512xbf16> to vector<16x256xbf16>
    %26 = vector.broadcast %4 : vector<1x256xbf16> to vector<16x256xbf16>
    %27 = arith.mulf %25, %26 : vector<16x256xbf16>
    %28 = tpu.concatenate %9, %10, %13, %16, %17, %20, %23, %24, %27 in 0 : vector<16x256xbf16>, vector<16x256xbf16>, vector<16x256xbf16>, vector<16x256xbf16>, vector<16x256xbf16>, vector<16x256xbf16>, vector<16x256xbf16>, vector<16x256xbf16>, vector<16x256xbf16> -> vector<144x256xbf16>
    %c0_7 = arith.constant 0 : index
    %c0_8 = arith.constant 0 : index
    %29 = vector.load %arg3[%c0_7, %c0_8] : memref<16x144xbf16, #tpu.memory_space<vmem>>, vector<16x144xbf16>
    %cst_9 = arith.constant dense<0.000000e+00> : vector<16x256xf32>
    %30 = tpu.matmul %29, %28, %cst_9 {dimension_numbers = #tpu.dot_dimension_numbers<[1], [0], [0], [1], [0, 0, 1, 1], [], []>} : vector<16x144xbf16>, vector<144x256xbf16>, vector<16x256xf32> -> vector<16x256xf32>
    %31 = vector.extract_strided_slice %2 {offsets = [0, 0], sizes = [16, 1], strides = [1, 1]} : vector<16x3xf32> to vector<16x1xf32>
    %32 = vector.broadcast %31 : vector<16x1xf32> to vector<16x256xf32>
    %33 = arith.addf %30, %32 : vector<16x256xf32>
    %cst_10 = arith.constant 0.000000e+00 : f32
    %34 = vector.broadcast %cst_10 : f32 to vector<16x256xf32>
    %35 = arith.maximumf %33, %34 : vector<16x256xf32>
    %36 = arith.truncf %35 : vector<16x256xf32> to vector<16x256xbf16>
    %cst_11 = arith.constant 0.000000e+00 : bf16
    %37 = vector.broadcast %cst_11 : bf16 to vector<16x128xbf16>
    %38 = tpu.concatenate %37, %36, %37 in 1 : vector<16x128xbf16>, vector<16x256xbf16>, vector<16x128xbf16> -> vector<16x512xbf16>
    %39 = vector.extract_strided_slice %38 {offsets = [0, 111], sizes = [16, 256], strides = [1, 1]} : vector<16x512xbf16> to vector<16x256xbf16>
    %40 = vector.broadcast %3 : vector<1x256xbf16> to vector<16x256xbf16>
    %41 = arith.mulf %39, %40 : vector<16x256xbf16>
    %42 = vector.extract_strided_slice %38 {offsets = [0, 112], sizes = [16, 256], strides = [1, 1]} : vector<16x512xbf16> to vector<16x256xbf16>
    %43 = vector.extract_strided_slice %38 {offsets = [0, 113], sizes = [16, 256], strides = [1, 1]} : vector<16x512xbf16> to vector<16x256xbf16>
    %44 = vector.broadcast %4 : vector<1x256xbf16> to vector<16x256xbf16>
    %45 = arith.mulf %43, %44 : vector<16x256xbf16>
    %46 = vector.extract_strided_slice %38 {offsets = [0, 127], sizes = [16, 256], strides = [1, 1]} : vector<16x512xbf16> to vector<16x256xbf16>
    %47 = vector.broadcast %3 : vector<1x256xbf16> to vector<16x256xbf16>
    %48 = arith.mulf %46, %47 : vector<16x256xbf16>
    %49 = vector.extract_strided_slice %38 {offsets = [0, 128], sizes = [16, 256], strides = [1, 1]} : vector<16x512xbf16> to vector<16x256xbf16>
    %50 = vector.extract_strided_slice %38 {offsets = [0, 129], sizes = [16, 256], strides = [1, 1]} : vector<16x512xbf16> to vector<16x256xbf16>
    %51 = vector.broadcast %4 : vector<1x256xbf16> to vector<16x256xbf16>
    %52 = arith.mulf %50, %51 : vector<16x256xbf16>
    %53 = vector.extract_strided_slice %38 {offsets = [0, 143], sizes = [16, 256], strides = [1, 1]} : vector<16x512xbf16> to vector<16x256xbf16>
    %54 = vector.broadcast %3 : vector<1x256xbf16> to vector<16x256xbf16>
    %55 = arith.mulf %53, %54 : vector<16x256xbf16>
    %56 = vector.extract_strided_slice %38 {offsets = [0, 144], sizes = [16, 256], strides = [1, 1]} : vector<16x512xbf16> to vector<16x256xbf16>
    %57 = vector.extract_strided_slice %38 {offsets = [0, 145], sizes = [16, 256], strides = [1, 1]} : vector<16x512xbf16> to vector<16x256xbf16>
    %58 = vector.broadcast %4 : vector<1x256xbf16> to vector<16x256xbf16>
    %59 = arith.mulf %57, %58 : vector<16x256xbf16>
    %60 = tpu.concatenate %41, %42, %45, %48, %49, %52, %55, %56, %59 in 0 : vector<16x256xbf16>, vector<16x256xbf16>, vector<16x256xbf16>, vector<16x256xbf16>, vector<16x256xbf16>, vector<16x256xbf16>, vector<16x256xbf16>, vector<16x256xbf16>, vector<16x256xbf16> -> vector<144x256xbf16>
    %c0_12 = arith.constant 0 : index
    %c0_13 = arith.constant 0 : index
    %61 = vector.load %arg4[%c0_12, %c0_13] : memref<16x144xbf16, #tpu.memory_space<vmem>>, vector<16x144xbf16>
    %cst_14 = arith.constant dense<0.000000e+00> : vector<16x256xf32>
    %62 = tpu.matmul %61, %60, %cst_14 {dimension_numbers = #tpu.dot_dimension_numbers<[1], [0], [0], [1], [0, 0, 1, 1], [], []>} : vector<16x144xbf16>, vector<144x256xbf16>, vector<16x256xf32> -> vector<16x256xf32>
    %63 = vector.extract_strided_slice %2 {offsets = [0, 1], sizes = [16, 1], strides = [1, 1]} : vector<16x3xf32> to vector<16x1xf32>
    %64 = vector.broadcast %63 : vector<16x1xf32> to vector<16x256xf32>
    %65 = arith.addf %62, %64 : vector<16x256xf32>
    %c0_15 = arith.constant 0 : index
    %c0_16 = arith.constant 0 : index
    %66 = vector.load %arg5[%c0_15, %c0_16] : memref<16x16xbf16, #tpu.memory_space<vmem>>, vector<16x16xbf16>
    %cst_17 = arith.constant dense<0.000000e+00> : vector<16x256xf32>
    %67 = tpu.matmul %66, %1, %cst_17 {dimension_numbers = #tpu.dot_dimension_numbers<[1], [0], [0], [1], [0, 0, 1, 1], [], []>} : vector<16x16xbf16>, vector<16x256xbf16>, vector<16x256xf32> -> vector<16x256xf32>
    %68 = vector.extract_strided_slice %2 {offsets = [0, 2], sizes = [16, 1], strides = [1, 1]} : vector<16x3xf32> to vector<16x1xf32>
    %69 = vector.broadcast %68 : vector<16x1xf32> to vector<16x256xf32>
    %70 = arith.addf %67, %69 : vector<16x256xf32>
    %71 = arith.addf %70, %65 : vector<16x256xf32>
    %cst_18 = arith.constant 0.000000e+00 : f32
    %72 = vector.broadcast %cst_18 : f32 to vector<16x256xf32>
    %73 = arith.maximumf %71, %72 : vector<16x256xf32>
    %c0_19 = arith.constant 0 : index
    %c0_20 = arith.constant 0 : index
    %74 = vector.load %arg6[%c0_19, %c0_20] : memref<8x16xbf16, #tpu.memory_space<vmem>>, vector<8x16xbf16>
    %75 = arith.truncf %73 : vector<16x256xf32> to vector<16x256xbf16>
    %cst_21 = arith.constant dense<0.000000e+00> : vector<8x256xf32>
    %76 = tpu.matmul %74, %75, %cst_21 {dimension_numbers = #tpu.dot_dimension_numbers<[1], [0], [0], [1], [0, 0, 1, 1], [], []>} : vector<8x16xbf16>, vector<16x256xbf16>, vector<8x256xf32> -> vector<8x256xf32>
    %c0_22 = arith.constant 0 : index
    %c0_23 = arith.constant 0 : index
    %c0_24 = arith.constant 0 : index
    %77 = vector.load %arg8[%c0_22, %c0_23, %c0_24] : memref<1x8x256xf32, #tpu.memory_space<vmem>>, vector<1x8x256xf32>
    %78 = vector.shape_cast %77 : vector<1x8x256xf32> to vector<8x256xf32>
    %79 = vector.shape_cast %76 : vector<8x256xf32> to vector<1x8x256xf32>
    tpu.vector_store %arg8[%c0_22, %c0_23, %c0_24], %79 {strides = array<i32>} : memref<1x8x256xf32, #tpu.memory_space<vmem>>, vector<1x8x256xf32>,
    return
  }
  func.func @transform_0(%arg0: i32) -> (i32, i32, i32) {
    %c0_i32 = arith.constant 0 : i32
    %c0_i32_0 = arith.constant 0 : i32
    %c0_i32_1 = arith.constant 0 : i32
    return %arg0, %c0_i32, %c0_i32_0 : i32, i32, i32
  }
  func.func @transform_1(%arg0: i32) -> (i32, i32) {
    %c0_i32 = arith.constant 0 : i32
    %c0_i32_0 = arith.constant 0 : i32
    %c0_i32_1 = arith.constant 0 : i32
    return %c0_i32, %c0_i32_0 : i32, i32
  }
  func.func @transform_2(%arg0: i32) -> (i32, i32) {
    %c0_i32 = arith.constant 0 : i32
    %c0_i32_0 = arith.constant 0 : i32
    %c0_i32_1 = arith.constant 0 : i32
    return %c0_i32, %c0_i32_0 : i32, i32
  }
  func.func @transform_3(%arg0: i32) -> (i32, i32) {
    %c0_i32 = arith.constant 0 : i32
    %c0_i32_0 = arith.constant 0 : i32
    %c0_i32_1 = arith.constant 0 : i32
    return %c0_i32, %c0_i32_0 : i32, i32
  }
  func.func @transform_4(%arg0: i32) -> (i32, i32) {
    %c0_i32 = arith.constant 0 : i32
    %c0_i32_0 = arith.constant 0 : i32
    %c0_i32_1 = arith.constant 0 : i32
    return %c0_i32, %c0_i32_0 : i32, i32
  }
  func.func @transform_5(%arg0: i32) -> (i32, i32) {
    %c0_i32 = arith.constant 0 : i32
    %c0_i32_0 = arith.constant 0 : i32
    %c0_i32_1 = arith.constant 0 : i32
    return %c0_i32, %c0_i32_0 : i32, i32
  }
  func.func @transform_6(%arg0: i32) -> (i32, i32) {
    %c0_i32 = arith.constant 0 : i32
    %c0_i32_0 = arith.constant 0 : i32
    %c0_i32_1 = arith.constant 0 : i32
    return %c0_i32, %c0_i32_0 : i32, i32
  }
  func.func @transform_7(%arg0: i32) -> (i32, i32, i32) {
    %c0_i32 = arith.constant 0 : i32
    %c0_i32_0 = arith.constant 0 : i32
    %c0_i32_1 = arith.constant 0 : i32
    return %arg0, %c0_i32, %c0_i32_0 : i32, i32, i32
  }
}

</mosaic_0001>

<llo_original>
// kernel: tpu_custom_call.1
$region0: #{tpu_custom_call.1}
  #allocation0 [shape = 'u32[]', space=smem, size = 0x4, offset = 0x4, fixed_abs, tag = 'smem constant byte address 0x4 - core index']
  #allocation1 [shape = 'u32[144,128]{1,0:T(1,128)}', space=vmem, size = 0x12000, scoped, tag = 'internal scratch']
  %s0 = inlined_call_operand.hbm [shape: bf16[2,16,256], index: 0, kind: input, shape index: {}]
  %s1 = inlined_call_operand.vmem [shape: bf16[2,256], index: 1, kind: input, shape index: {}]
  %s2 = inlined_call_operand.vmem [shape: bf16[16,144], index: 2, kind: input, shape index: {}]
  %s3 = inlined_call_operand.hbm [shape: bf16[16,144], index: 3, kind: input, shape index: {}]
  %s4 = inlined_call_operand.vmem [shape: bf16[16,16], index: 4, kind: input, shape index: {}]
  %s5 = inlined_call_operand.vmem [shape: bf16[8,16], index: 5, kind: input, shape index: {}]
  %s6 = inlined_call_operand.vmem [shape: f32[16,3], index: 6, kind: input, shape index: {}]
  %s7 = inlined_call_operand.hbm [shape: f32[2,8,256], index: 7, kind: output, shape index: {}]
  %s8 = sld [smem:[#allocation0]]
  $region69: #{tpu_custom_call.1} parent=0
    _
  %s10 = ssub.s32 1, %s8
  %s11 = scalar_select 0, %s10, %s8
  $region1: #{tpu_custom_call.1} parent=0
    #allocation2 [shape = 'u8[16384]{0}', space=vmem, size = 0x4000, scoped, tag = 'input window, operand 0']
    #allocation3 [shape = 's32[2]{0}', space=sflag, size = 0x8, scoped, tag = 'scoped memory for tpu_custom_call.1']
    #allocation4 [shape = 's32[2]{0}', space=sflag, size = 0x8, scoped, tag = 'scoped memory for tpu_custom_call.1']
    #allocation5 [shape = 'u8[8192]{0}', space=vmem, size = 0x2000, scoped, tag = 'input window, operand 3, single buffered']
    #allocation6 [shape = 's32[1]{0}', space=sflag, size = 0x4, scoped, tag = 'scoped memory for tpu_custom_call.1']
    #allocation7 [shape = 'u8[16384]{0}', space=vmem, size = 0x4000, scoped, tag = 'output window, operand 0']
    %12 = vsyncpa [#allocation3], 0
    %s13 = scalar_lea.sflag [#allocation3], 1
    %14 = vsyncpa %s13, 0
    %15 = vsyncpa [#allocation6], 0
    %16 = vsyncpa [#allocation4], 0
    %s17 = scalar_lea.sflag [#allocation4], 1
    %18 = vsyncpa %s17, 0
    loop: start=0, step=1, limit=4
    $region2: #{tpu_custom_call.1} parent=1 // loop_pre_header
      _
    $region3: #{tpu_custom_call.1} parent=1 // loop_header
      %s20 = sphi 0, %s24
      %p21 = scmp.ge.s32.totalorder %s20, 4
      %s30 = sphi 0, %s32
      %s33 = sphi 0, %s30
      %s34 = sphi 0, %s33
      %s50 = sphi 0, %s34
      %s54 = sphi 0, %s54
      %s56 = sphi 0, %s54
      %s57 = sphi 0, %s56
      %s71 = sphi 0, %s57
      %s75 = sphi 0, %s75
      %s77 = sphi 0, %s75
      %s78 = sphi 0, %s77
      %s92 = sphi 0, %s78
      %s96 = sphi 0, %s96
      %s98 = sphi 0, %s96
      %s99 = sphi 0, %s98
      %s113 = sphi 0, %s99
      %s117 = sphi 0, %s117
      %s119 = sphi 0, %s117
      %s120 = sphi 0, %s119
      %s134 = sphi 0, %s120
      %s138 = sphi 0, %s138
      %s140 = sphi 0, %s138
      %s141 = sphi 0, %s140
      %s155 = sphi 0, %s141
      %s159 = sphi 0, %s159
      %s161 = sphi 0, %s159
      %s162 = sphi 0, %s161
      %s176 = sphi 0, %s162
      %s182 = sphi 0, %s184
      %s185 = sphi 0, %s182
      %s186 = sphi 0, %s185
      %s202 = sphi 0, %s186
    $region4: #{tpu_custom_call.1} parent=1 // loop_header_branch
      %23 = sbr.rel (%p21) target = $region8
    $region5: #{tpu_custom_call.1} parent=1 // loop_body
      %s25 = ssub.s32 %s20, 1
      %s26 = ssub.s32 %s20, 2
      %s27 = sadd.s32 %s20, 1
      %s28 = ssub.s32 %s20, %s27
      %p29 = scmp.eq.s32.totalorder %s28, 0
      %s31 = sadd.s32 %s30, 1
      %s32 = scalar_select %p29, %s30, %s31
      %p35 = pneg %p29
      %p36 = scmp.eq.s32.totalorder %s20, 1
      %p37 = por %p35, %p36
      %p38 = scmp.ne.s32.totalorder %s30, %s33
      %p39 = scmp.eq.s32.totalorder %s20, 0
      %p40 = por %p38, %p39
      %p41 = scmp.ne.s32.totalorder %s30, %s33
      %p42 = scmp.eq.s32.totalorder %s25, 1
      %p43 = por %p41, %p42
      %p44 = scmp.ne.s32.totalorder %s33, %s34
      %p45 = scmp.eq.s32.totalorder %s25, 0
      %p46 = por %p44, %p45
      %p47 = scmp.ne.s32.totalorder %s33, %s34
      %p48 = scmp.eq.s32.totalorder %s26, 1
      %p49 = por %p47, %p48
      %p51 = scmp.ne.s32.totalorder %s34, %s50
      %p52 = scmp.eq.s32.totalorder %s26, 0
      %p53 = por %p51, %p52
      %s55 = sadd.s32 %s54, 1
      %p58 = scmp.eq.s32.totalorder %s20, 1
      %p59 = scmp.ne.s32.totalorder %s54, %s56
      %p60 = scmp.eq.s32.totalorder %s20, 0
      %p61 = por %p59, %p60
      %p62 = scmp.ne.s32.totalorder %s54, %s56
      %p63 = scmp.eq.s32.totalorder %s25, 1
      %p64 = por %p62, %p63
      %p65 = scmp.ne.s32.totalorder %s56, %s57
      %p66 = scmp.eq.s32.totalorder %s25, 0
      %p67 = por %p65, %p66
      %p68 = scmp.ne.s32.totalorder %s56, %s57
      %p69 = scmp.eq.s32.totalorder %s26, 1
      %p70 = por %p68, %p69
      %p72 = scmp.ne.s32.totalorder %s57, %s71
      %p73 = scmp.eq.s32.totalorder %s26, 0
      %p74 = por %p72, %p73
      %s76 = sadd.s32 %s75, 1
      %p79 = scmp.eq.s32.totalorder %s20, 1
      %p80 = scmp.ne.s32.totalorder %s75, %s77
      %p81 = scmp.eq.s32.totalorder %s20, 0
      %p82 = por %p80, %p81
      %p83 = scmp.ne.s32.totalorder %s75, %s77
      %p84 = scmp.eq.s32.totalorder %s25, 1
      %p85 = por %p83, %p84
      %p86 = scmp.ne.s32.totalorder %s77, %s78
      %p87 = scmp.eq.s32.totalorder %s25, 0
      %p88 = por %p86, %p87
      %p89 = scmp.ne.s32.totalorder %s77, %s78
      %p90 = scmp.eq.s32.totalorder %s26, 1
      %p91 = por %p89, %p90
      %p93 = scmp.ne.s32.totalorder %s78, %s92
      %p94 = scmp.eq.s32.totalorder %s26, 0
      %p95 = por %p93, %p94
      %s97 = sadd.s32 %s96, 1
      %p100 = scmp.eq.s32.totalorder %s20, 1
      %p101 = scmp.ne.s32.totalorder %s96, %s98
      %p102 = scmp.eq.s32.totalorder %s20, 0
      %p103 = por %p101, %p102
      %p104 = scmp.ne.s32.totalorder %s96, %s98
      %p105 = scmp.eq.s32.totalorder %s25, 1
      %p106 = por %p104, %p105
      %p107 = scmp.ne.s32.totalorder %s98, %s99
      %p108 = scmp.eq.s32.totalorder %s25, 0
      %p109 = por %p107, %p108
      %p110 = scmp.ne.s32.totalorder %s98, %s99
      %p111 = scmp.eq.s32.totalorder %s26, 1
      %p112 = por %p110, %p111
      %p114 = scmp.ne.s32.totalorder %s99, %s113
      %p115 = scmp.eq.s32.totalorder %s26, 0
      %p116 = por %p114, %p115
      %s118 = sadd.s32 %s117, 1
      %p121 = scmp.eq.s32.totalorder %s20, 1
      %p122 = scmp.ne.s32.totalorder %s117, %s119
      %p123 = scmp.eq.s32.totalorder %s20, 0
      %p124 = por %p122, %p123
      %p125 = scmp.ne.s32.totalorder %s117, %s119
      %p126 = scmp.eq.s32.totalorder %s25, 1
      %p127 = por %p125, %p126
      %p128 = scmp.ne.s32.totalorder %s119, %s120
      %p129 = scmp.eq.s32.totalorder %s25, 0
      %p130 = por %p128, %p129
      %p131 = scmp.ne.s32.totalorder %s119, %s120
      %p132 = scmp.eq.s32.totalorder %s26, 1
      %p133 = por %p131, %p132
      %p135 = scmp.ne.s32.totalorder %s120, %s134
      %p136 = scmp.eq.s32.totalorder %s26, 0
      %p137 = por %p135, %p136
      %s139 = sadd.s32 %s138, 1
      %p142 = scmp.eq.s32.totalorder %s20, 1
      %p143 = scmp.ne.s32.totalorder %s138, %s140
      %p144 = scmp.eq.s32.totalorder %s20, 0
      %p145 = por %p143, %p144
      %p146 = scmp.ne.s32.totalorder %s138, %s140
      %p147 = scmp.eq.s32.totalorder %s25, 1
      %p148 = por %p146, %p147
      %p149 = scmp.ne.s32.totalorder %s140, %s141
      %p150 = scmp.eq.s32.totalorder %s25, 0
      %p151 = por %p149, %p150
      %p152 = scmp.ne.s32.totalorder %s140, %s141
      %p153 = scmp.eq.s32.totalorder %s26, 1
      %p154 = por %p152, %p153
      %p156 = scmp.ne.s32.totalorder %s141, %s155
      %p157 = scmp.eq.s32.totalorder %s26, 0
      %p158 = por %p156, %p157
      %s160 = sadd.s32 %s159, 1
      %p163 = scmp.eq.s32.totalorder %s20, 1
      %p164 = scmp.ne.s32.totalorder %s159, %s161
      %p165 = scmp.eq.s32.totalorder %s20, 0
      %p166 = por %p164, %p165
      %p167 = scmp.ne.s32.totalorder %s159, %s161
      %p168 = scmp.eq.s32.totalorder %s25, 1
      %p169 = por %p167, %p168
      %p170 = scmp.ne.s32.totalorder %s161, %s162
      %p171 = scmp.eq.s32.totalorder %s25, 0
      %p172 = por %p170, %p171
      %p173 = scmp.ne.s32.totalorder %s161, %s162
      %p174 = scmp.eq.s32.totalorder %s26, 1
      %p175 = por %p173, %p174
      %p177 = scmp.ne.s32.totalorder %s162, %s176
      %p178 = scmp.eq.s32.totalorder %s26, 0
      %p179 = por %p177, %p178
      %s180 = ssub.s32 %s20, %s27
      %p181 = scmp.eq.s32.totalorder %s180, 0
      %s183 = sadd.s32 %s182, 1
      %s184 = scalar_select %p181, %s182, %s183
      %p187 = pneg %p181
      %p188 = scmp.eq.s32.totalorder %s20, 1
      %p189 = por %p187, %p188
      %p190 = scmp.ne.s32.totalorder %s182, %s185
      %p191 = scmp.eq.s32.totalorder %s20, 0
      %p192 = por %p190, %p191
      %p193 = scmp.ne.s32.totalorder %s182, %s185
      %p194 = scmp.eq.s32.totalorder %s25, 1
      %p195 = por %p193, %p194
      %p196 = scmp.ne.s32.totalorder %s185, %s186
      %p197 = scmp.eq.s32.totalorder %s25, 0
      %p198 = por %p196, %p197
      %p199 = scmp.ne.s32.totalorder %s185, %s186
      %p200 = scmp.eq.s32.totalorder %s26, 1
      %p201 = por %p199, %p200
      %p203 = scmp.ne.s32.totalorder %s186, %s202
      %p204 = scmp.eq.s32.totalorder %s26, 0
      %p205 = por %p203, %p204
      %p206 = scmp.le.s32.totalorder 1, %s20
      %p207 = scmp.lt.s32.totalorder %s20, 3
      %p208 = pnand %p206, %p207
      %p209 = pneg %p208
      // Predicated region
      $region9: #{tpu_custom_call.1} parent=5 // pred_check
        _
      $region10: #{tpu_custom_call.1} parent=5 // pred_check_branch
        %211 = sbr.rel (%p208) target = $region12
      $region11: #{tpu_custom_call.1} parent=5 // pred_region
        %s212 = ssub.s32 %s20, 1
        // Predicated region
        $region13: #{tpu_custom_call.1} parent=11 // pred_check
          %p213 = pneg %p67
        $region14: #{tpu_custom_call.1} parent=11 // pred_check_branch
          %215 = sbr.rel (%p213) target = $region16
        $region15: #{tpu_custom_call.1} parent=11 // pred_region
          _
        $region16: #{tpu_custom_call.1} parent=11 // pred_fallthru
          _
        // Predicated region
        $region17: #{tpu_custom_call.1} parent=11 // pred_check
          %p216 = pneg %p88
        $region18: #{tpu_custom_call.1} parent=11 // pred_check_branch
          %218 = sbr.rel (%p216) target = $region20
        $region19: #{tpu_custom_call.1} parent=11 // pred_region
          _
        $region20: #{tpu_custom_call.1} parent=11 // pred_fallthru
          _
        // Predicated region
        $region21: #{tpu_custom_call.1} parent=11 // pred_check
          %p219 = pneg %p109
        $region22: #{tpu_custom_call.1} parent=11 // pred_check_branch
          %221 = sbr.rel (%p219) target = $region24
        $region23: #{tpu_custom_call.1} parent=11 // pred_region
          %s223 = ssub.s32 256, 256
          %224 = vsyncadd [#allocation6], %s223
          %s225 = sshll.u32 [#allocation5], 4
          %s226 = int_to_ptr.vmem [resolvable:$true] %s225
          %231 = dma.hbm_to_vmem [thread:$0]  %s3, 256, %s226, [#allocation6], 128, 128, 8
        $region24: #{tpu_custom_call.1} parent=11 // pred_fallthru
          _
        // Predicated region
        $region25: #{tpu_custom_call.1} parent=11 // pred_check
          %p232 = pneg %p130
        $region26: #{tpu_custom_call.1} parent=11 // pred_check_branch
          %234 = sbr.rel (%p232) target = $region28
        $region27: #{tpu_custom_call.1} parent=11 // pred_region
          _
        $region28: #{tpu_custom_call.1} parent=11 // pred_fallthru
          _
        // Predicated region
        $region29: #{tpu_custom_call.1} parent=11 // pred_check
          %p235 = pneg %p151
        $region30: #{tpu_custom_call.1} parent=11 // pred_check_branch
          %237 = sbr.rel (%p235) target = $region32
        $region31: #{tpu_custom_call.1} parent=11 // pred_region
          _
        $region32: #{tpu_custom_call.1} parent=11 // pred_fallthru
          _
        // Predicated region
        $region33: #{tpu_custom_call.1} parent=11 // pred_check
          %p238 = pneg %p172
        $region34: #{tpu_custom_call.1} parent=11 // pred_check_branch
          %240 = sbr.rel (%p238) target = $region36
        $region35: #{tpu_custom_call.1} parent=11 // pred_region
          _
        $region36: #{tpu_custom_call.1} parent=11 // pred_fallthru
          _
      $region12: #{tpu_custom_call.1} parent=5 // pred_fallthru
        _
      %p241 = scmp.lt.s32.totalorder %s20, 2
      // Predicated region
      $region37: #{tpu_custom_call.1} parent=5 // pred_check
        %p242 = pneg %p241
      $region38: #{tpu_custom_call.1} parent=5 // pred_check_branch
        %244 = sbr.rel (%p242) target = $region40
      $region39: #{tpu_custom_call.1} parent=5 // pred_region
        // Predicated region
        $region41: #{tpu_custom_call.1} parent=39 // pred_check
          %p245 = pneg %p40
        $region42: #{tpu_custom_call.1} parent=39 // pred_check_branch
          %247 = sbr.rel (%p245) target = $region44
        $region43: #{tpu_custom_call.1} parent=39 // pred_region
          %s248 = sand.u32 %s30, 1
          %s249 = scalar_lea.sflag [#allocation3], %s248
          %s250 = sand.u32 %s30, 1
          %s251 = smul.addr %s250, 16
          %s252 = scalar_lea.vmem [#allocation2], %s251
          %s254 = ssub.s32 256, 256
          %255 = vsyncadd %s249, %s254
          %s256 = smul.addr %s20, 4
          %s257 = smul.addr %s256, 64
          %s258 = scalar_lea.hbm %s0, %s257
          %s259 = sshll.u32 %s252, 4
          %s260 = int_to_ptr.vmem [resolvable:$true] %s259
          %265 = dma.hbm_to_vmem [thread:$0]  %s258, 256, %s260, %s249, 128, 128, 8
        $region44: #{tpu_custom_call.1} parent=39 // pred_fallthru
          _
      $region40: #{tpu_custom_call.1} parent=5 // pred_fallthru
        _
      %p266 = scmp.le.s32.totalorder 1, %s20
      %p267 = scmp.lt.s32.totalorder %s20, 3
      %p268 = pnand %p266, %p267
      %p269 = pneg %p268
      // Predicated region
      $region45: #{tpu_custom_call.1} parent=5 // pred_check
        _
      $region46: #{tpu_custom_call.1} parent=5 // pred_check_branch
        %271 = sbr.rel (%p268) target = $region48
      $region47: #{tpu_custom_call.1} parent=5 // pred_region
        %s272 = ssub.s32 %s20, 1
        %s273 = sand.u32 %s33, 1
        %s274 = scalar_lea.sflag [#allocation3], %s273
        %s275 = sand.u32 %s33, 1
        %s276 = smul.addr %s275, 16
        %s277 = scalar_lea.vmem [#allocation2], %s276
        // Predicated region
        $region49: #{tpu_custom_call.1} parent=47 // pred_check
          %p278 = pneg %p46
        $region50: #{tpu_custom_call.1} parent=47 // pred_check_branch
          %280 = sbr.rel (%p278) target = $region52
        $region51: #{tpu_custom_call.1} parent=47 // pred_region
          %281 = dma.done %s274, 256
        $region52: #{tpu_custom_call.1} parent=47 // pred_fallthru
          _
        // Predicated region
        $region53: #{tpu_custom_call.1} parent=47 // pred_check
          %p282 = pneg %p109
        $region54: #{tpu_custom_call.1} parent=47 // pred_check_branch
          %284 = sbr.rel (%p282) target = $region56
        $region55: #{tpu_custom_call.1} parent=47 // pred_region
          %285 = dma.done [#allocation6], 256
        $region56: #{tpu_custom_call.1} parent=47 // pred_fallthru
          _
        %s286 = sand.u32 %s33, 1
        %s287 = scalar_lea.sflag [#allocation3], %s286
        %s288 = sand.u32 %s33, 1
        %s289 = smul.addr %s288, 16
        %s290 = scalar_lea.vmem [#allocation2], %s289
        %p291 = pneg %p46
        %p292 = pneg %p43
        %p293 = pneg %p67
        %p294 = pneg %p64
        %p295 = pneg %p88
        %p296 = pneg %p85
        %p297 = pneg %p109
        %p298 = pneg %p106
        %p299 = pneg %p130
        %p300 = pneg %p127
        %p301 = pneg %p151
        %p302 = pneg %p148
        %p303 = pneg %p172
        %p304 = pneg %p169
        %p305 = pneg %p198
        %p306 = pneg %p195
        %s307 = sand.u32 %s185, 1
        %s308 = scalar_lea.sflag [#allocation4], %s307
        %s309 = sand.u32 %s185, 1
        %s310 = smul.addr %s309, 16
        %s311 = scalar_lea.vmem [#allocation7], %s310
        %v313 = vld [vmem:[%s277] sm:$0xff]
        %v314 = vld [vmem:[%s277 + $0x8] sm:$0xff]
        %v315 = vld [vmem:[%s6] sm:$0xff]
        %v316 = vld [vmem:[%s6 + $0x8] sm:$0xff]
        %v317 = vld [vmem:[%s1] sm:$0x3]
        %v320 = vunpack.c.l.b16 %v313
        %v321 = vunpack.c.h.b16 %v313
        %v322 = vunpack.c.l.b16 %v314
        %v323 = vunpack.c.h.b16 %v314
        %v324 = vpack.c.b16 %v322, %v320
        %v325 = vpack.c.b16 %v323, %v321
        %v330 = vunpack.c.l.s4 1966171168
        %v331 = vunpack.c.0.s8 %v330
        %v332 = vlaneseq
        %v333 = vshrl.u32 %v332, 7
        %v334 = vsub.s32 %v331, %v333
        %v335 = vrot.slane %v317, %v334
        %v336 = vcombine.high %v335, %v335
        %v338 = vunpack.c.l.s4 1966171168
        %v339 = vunpack.c.0.s8 %v338
        %v340 = vlaneseq
        %v341 = vshrl.u32 %v340, 7
        %v342 = vsub.s32 %v339, %v341
        %v343 = vrot.slane %v335, %v342
        %v345 = vunpack.c.l.s4 1966171168
        %v346 = vunpack.c.0.s8 %v345
        %v347 = vlaneseq
        %v348 = vshrl.u32 %v347, 7
        %v349 = vsub.s32 %v346, %v348
        %v350 = vrot.slane %v336, %v349
        %v352 = vpack.i.b16 %v343, %v343
        %v354 = vlaneseq
        %v355 = vshrl.u32 %v354, 7
        %v356 = vsub.s32 0, %v355
        %v357 = vrot.slane %v352, %v356
        %v359 = vpack.i.b16 %v350, %v350
        %v361 = vlaneseq
        %v362 = vshrl.u32 %v361, 7
        %v363 = vsub.s32 0, %v362
        %v364 = vrot.slane %v359, %v363
        %367 = vrot.lane.b32.xlu0 %v357, 111
        %v368 = vpop.permute.xlu0 %367
        %369 = vrot.lane.b32.xlu0 %v364, 111
        %v370 = vpop.permute.xlu0 %369
        %vm371 = vcmask 908288
        %v372 = vsel %vm371, %v368, %v370
        %v376 = vmul.bf16 %v368, 0
        %v377 = vmul.bf16 %v324, %v372
        %v378 = vmul.bf16 %v325, %v370
        %v379 = vshrl.u32 %v343, 16
        %v380 = vpack.i.b16 %v379, %v379
        %v382 = vlaneseq
        %v383 = vshrl.u32 %v382, 7
        %v384 = vsub.s32 0, %v383
        %v385 = vrot.slane %v380, %v384
        %v386 = vshrl.u32 %v350, 16
        %v387 = vpack.i.b16 %v386, %v386
        %v389 = vlaneseq
        %v390 = vshrl.u32 %v389, 7
        %v391 = vsub.s32 0, %v390
        %v392 = vrot.slane %v387, %v391
        %395 = vrot.lane.b32.xlu0 %v385, 113
        %v396 = vpop.permute.xlu0 %395
        %397 = vrot.lane.b32.xlu0 %v392, 113
        %v398 = vpop.permute.xlu0 %397
        %vm399 = vcmask 924672
        %v400 = vsel %vm399, %v396, %v398
        %v404 = vmul.bf16 %v396, 0
        %v405 = vmul.bf16 %v324, %v400
        %v406 = vmul.bf16 %v325, %v398
        %407 = vrot.lane.b32.xlu0 %v357, 127
        %v408 = vpop.permute.xlu0 %407
        %409 = vrot.lane.b32.xlu0 %v364, 127
        %v410 = vpop.permute.xlu0 %409
        %vm411 = vcmask 1039360
        %v412 = vsel %vm411, %v408, %v410
        %v416 = vmul.bf16 %v408, 0
        %v417 = vmul.bf16 %v324, %v412
        %v418 = vmul.bf16 %v325, %v410
        %419 = vrot.lane.b32.xlu0 %v385, 1
        %v420 = vpop.permute.xlu0 %419
        %421 = vrot.lane.b32.xlu0 %v392, 1
        %v422 = vpop.permute.xlu0 %421
        %vm423 = vcmask 7168
        %v424 = vsel %vm423, %v420, %v422
        %v428 = vmul.bf16 %v324, %v420
        %v429 = vmul.bf16 %v325, %v424
        %v430 = vmul.bf16 %v422, 0
        %431 = vrot.lane.b32.xlu0 %v357, 15
        %v432 = vpop.permute.xlu0 %431
        %433 = vrot.lane.b32.xlu0 %v364, 15
        %v434 = vpop.permute.xlu0 %433
        %vm435 = vcmask 121856
        %v436 = vsel %vm435, %v432, %v434
        %v440 = vmul.bf16 %v324, %v432
        %v441 = vmul.bf16 %v325, %v436
        %v442 = vmul.bf16 %v434, 0
        %443 = vrot.lane.b32.xlu0 %v385, 17
        %v444 = vpop.permute.xlu0 %443
        %445 = vrot.lane.b32.xlu0 %v392, 17
        %v446 = vpop.permute.xlu0 %445
        %vm447 = vcmask 138240
        %v448 = vsel %vm447, %v444, %v446
        %v452 = vmul.bf16 %v324, %v444
        %v453 = vmul.bf16 %v325, %v448
        %v454 = vmul.bf16 %v446, 0
        %456 = vrot.lane.b32.xlu0 0, 127
        %v457 = vpop.permute.xlu0 %456
        %458 = vrot.lane.b32.xlu0 %v324, 127
        %v459 = vpop.permute.xlu0 %458
        %460 = vrot.lane.b32.xlu0 %v325, 127
        %v461 = vpop.permute.xlu0 %460
        %v462 = vsel %vm411, %v457, %v459
        %v463 = vsel %vm411, %v459, %v461
        %467 = vrot.lane.b32.xlu0 %v404, 126
        %v468 = vpop.permute.xlu0 %467
        %469 = vrot.lane.b32.xlu0 %v405, 126
        %v470 = vpop.permute.xlu0 %469
        %471 = vrot.lane.b32.xlu0 %v406, 126
        %v472 = vpop.permute.xlu0 %471
        %vm473 = vcmask 1031168
        %v474 = vsel %vm473, %v468, %v470
        %v475 = vsel %vm473, %v470, %v472
        %479 = vrot.lane.b32.xlu0 %v416, 112
        %v480 = vpop.permute.xlu0 %479
        %481 = vrot.lane.b32.xlu0 %v417, 112
        %v482 = vpop.permute.xlu0 %481
        %483 = vrot.lane.b32.xlu0 %v418, 112
        %v484 = vpop.permute.xlu0 %483
        %vm485 = vcmask 916480
        %v486 = vsel %vm485, %v480, %v482
        %v487 = vsel %vm485, %v482, %v484
        %488 = vrot.lane.b32.xlu0 %v324, 111
        %v489 = vpop.permute.xlu0 %488
        %490 = vrot.lane.b32.xlu0 %v325, 111
        %v491 = vpop.permute.xlu0 %490
        %v492 = vsel %vm371, %v489, %v491
        %496 = vrot.lane.b32.xlu0 %v428, 110
        %v497 = vpop.permute.xlu0 %496
        %498 = vrot.lane.b32.xlu0 %v429, 110
        %v499 = vpop.permute.xlu0 %498
        %500 = vrot.lane.b32.xlu0 %v430, 110
        %v501 = vpop.permute.xlu0 %500
        %vm502 = vcmask 900096
        %v503 = vsel %vm502, %v497, %v499
        %v504 = vsel %vm502, %v499, %v501
        %508 = vrot.lane.b32.xlu0 %v440, 96
        %v509 = vpop.permute.xlu0 %508
        %510 = vrot.lane.b32.xlu0 %v441, 96
        %v511 = vpop.permute.xlu0 %510
        %512 = vrot.lane.b32.xlu0 %v442, 96
        %v513 = vpop.permute.xlu0 %512
        %vm514 = vcmask 785408
        %v515 = vsel %vm514, %v509, %v511
        %v516 = vsel %vm514, %v511, %v513
        %517 = vrot.lane.b32.xlu0 %v324, 95
        %v518 = vpop.permute.xlu0 %517
        %519 = vrot.lane.b32.xlu0 %v325, 95
        %v520 = vpop.permute.xlu0 %519
        %521 = vrot.lane.b32.xlu0 0, 95
        %v522 = vpop.permute.xlu0 %521
        %vm523 = vcmask 777216
        %v524 = vsel %vm523, %v518, %v520
        %v525 = vsel %vm523, %v520, %v522
        %529 = vrot.lane.b32.xlu0 %v452, 94
        %v530 = vpop.permute.xlu0 %529
        %531 = vrot.lane.b32.xlu0 %v453, 94
        %v532 = vpop.permute.xlu0 %531
        %533 = vrot.lane.b32.xlu0 %v454, 94
        %v534 = vpop.permute.xlu0 %533
        %vm535 = vcmask 769024
        %v536 = vsel %vm535, %v530, %v532
        %v537 = vsel %vm535, %v532, %v534
        %v538 = vld [vmem:[%s2] sm:$0xff]
        %v539 = vld [vmem:[%s2 + $0x8] sm:$0xff]
        %541 = vset.pattern.permute.xlu0 0
        %542 = vperm.xlu0 %541, %v315
        %v543 = vpop.permute.xlu0 %542
        %546 = vset.pattern.permute.xlu0 0
        %547 = vperm.xlu0 %546, %v316
        %v548 = vpop.permute.xlu0 %547
        %v552 = vunpack.c.l.b16 %v538
        %v553 = vunpack.c.h.b16 %v538
        %v554 = vunpack.c.l.b16 %v539
        %v555 = vunpack.c.h.b16 %v539
        %v556 = vpack.c.b16 %v554, %v552
        %v557 = vpack.c.b16 %v555, %v553
        %562 = vrot.lane.b32.xlu0 %v376, 17
        %v563 = vpop.permute.xlu0 %562
        %564 = vrot.lane.b32.xlu0 %v377, 17
        %v565 = vpop.permute.xlu0 %564
        %566 = vrot.lane.b32.xlu0 %v378, 17
        %v567 = vpop.permute.xlu0 %566
        %568 = vrot.lane.b32.xlu0 %v462, 17
        %v569 = vpop.permute.xlu0 %568
        %570 = vrot.lane.b32.xlu0 %v463, 17
        %v571 = vpop.permute.xlu0 %570
        %572 = vrot.lane.b32.xlu0 %v461, 17
        %v573 = vpop.permute.xlu0 %572
        %574 = vrot.lane.b32.xlu0 %v474, 17
        %v575 = vpop.permute.xlu0 %574
        %576 = vrot.lane.b32.xlu0 %v475, 17
        %v577 = vpop.permute.xlu0 %576
        %578 = vrot.lane.b32.xlu0 %v472, 17
        %v579 = vpop.permute.xlu0 %578
        %580 = vrot.lane.b32.xlu0 %v486, 17
        %v581 = vpop.permute.xlu0 %580
        %582 = vrot.lane.b32.xlu0 %v487, 17
        %v583 = vpop.permute.xlu0 %582
        %584 = vrot.lane.b32.xlu0 %v484, 17
        %v585 = vpop.permute.xlu0 %584
        %586 = vrot.lane.b32.xlu0 %v489, 17
        %v587 = vpop.permute.xlu0 %586
        %588 = vrot.lane.b32.xlu0 %v492, 17
        %v589 = vpop.permute.xlu0 %588
        %590 = vrot.lane.b32.xlu0 %v491, 17
        %v591 = vpop.permute.xlu0 %590
        %592 = vrot.lane.b32.xlu0 %v497, 17
        %v593 = vpop.permute.xlu0 %592
        %594 = vrot.lane.b32.xlu0 %v503, 17
        %v595 = vpop.permute.xlu0 %594
        %596 = vrot.lane.b32.xlu0 %v504, 17
        %v597 = vpop.permute.xlu0 %596
        %598 = vrot.lane.b32.xlu0 %v509, 17
        %v599 = vpop.permute.xlu0 %598
        %600 = vrot.lane.b32.xlu0 %v515, 17
        %v601 = vpop.permute.xlu0 %600
        %602 = vrot.lane.b32.xlu0 %v516, 17
        %v603 = vpop.permute.xlu0 %602
        %604 = vrot.lane.b32.xlu0 %v518, 17
        %v605 = vpop.permute.xlu0 %604
        %606 = vrot.lane.b32.xlu0 %v524, 17
        %v607 = vpop.permute.xlu0 %606
        %608 = vrot.lane.b32.xlu0 %v525, 17
        %v609 = vpop.permute.xlu0 %608
        %610 = vrot.lane.b32.xlu0 %v530, 17
        %v611 = vpop.permute.xlu0 %610
        %612 = vrot.lane.b32.xlu0 %v536, 17
        %v613 = vpop.permute.xlu0 %612
        %614 = vrot.lane.b32.xlu0 %v537, 17
        %v615 = vpop.permute.xlu0 %614
        %v616 = vsel %vm447, %v563, %v565
        %v617 = vsel %vm447, %v565, %v567
        %v618 = vsel %vm447, %v569, %v571
        %v619 = vsel %vm447, %v571, %v573
        %v620 = vsel %vm447, %v575, %v577
        %v621 = vsel %vm447, %v577, %v579
        %v622 = vsel %vm447, %v581, %v583
        %v623 = vsel %vm447, %v583, %v585
        %v624 = vsel %vm447, %v587, %v589
        %v625 = vsel %vm447, %v589, %v591
        %v626 = vsel %vm447, %v593, %v595
        %v627 = vsel %vm447, %v595, %v597
        %v628 = vsel %vm447, %v599, %v601
        %v629 = vsel %vm447, %v601, %v603
        %v630 = vsel %vm447, %v605, %v607
        %v631 = vsel %vm447, %v607, %v609
        %v632 = vsel %vm447, %v611, %v613
        %v633 = vsel %vm447, %v613, %v615
        %vm652 = vcmask 130048
        %v654 = vsel %vm652, %v557, 0
        %656 = vmatprep.subr.bf16.mxu0 %v617
        %657 = vmatpush1.bf16.msra.mxu0 %v616
        %658 = vmatprep.subr.bf16.mxu0 %v619
        %659 = vmatpush1.bf16.msra.mxu0 %v618
        %660 = vmatprep.subr.bf16.mxu0 %v621
        %661 = vmatpush1.bf16.msra.mxu0 %v620
        %662 = vmatprep.subr.bf16.mxu0 %v623
        %663 = vmatpush1.bf16.msra.mxu0 %v622
        %664 = vmatprep.subr.bf16.mxu0 %v625
        %665 = vmatpush1.bf16.msra.mxu0 %v624
        %666 = vmatprep.subr.bf16.mxu0 %v627
        %667 = vmatpush1.bf16.msra.mxu0 %v626
        %668 = vmatprep.subr.bf16.mxu0 %v629
        %669 = vmatpush1.bf16.msra.mxu0 %v628
        %670 = vmatprep.subr.bf16.mxu0 %v631
        %671 = vmatpush1.bf16.msra.mxu0 %v630
        %672 = vmatprep.subr.bf16.mxu0 %v633
        %673 = vmatpush1.bf16.msra.mxu0 %v632
        %674 = vmatprep.subr.bf16.mxu0 0
        %675 = vmatpush1.bf16.msra.mxu0 0
        %676 = vmatprep.subr.bf16.mxu0 0
        %677 = vmatpush1.bf16.msra.mxu0 0
        %678 = vmatprep.subr.bf16.mxu0 0
        %679 = vmatpush1.bf16.msra.mxu0 0
        %680 = vmatprep.subr.bf16.mxu0 0
        %681 = vmatpush1.bf16.msra.mxu0 0
        %682 = vmatprep.subr.bf16.mxu0 0
        %683 = vmatpush1.bf16.msra.mxu0 0
        %684 = vmatprep.subr.bf16.mxu0 0
        %685 = vmatpush1.bf16.msra.mxu0 0
        %686 = vmatprep.subr.bf16.mxu0 0
        %687 = vmatpush1.bf16.msra.mxu0 0
        %688 = vmatprep.mubr.bf16.mxu0 %v654
        %689 = vmatmul.mubr.bf16.gmra.mrb[0].mxu0 %v556
        %v690 = vpop.f32.mrb[0].mxu0
        %v691 = vadd.f32 %v543, %v690
        %v692 = vpop.f32.mrb[0].mxu0
        %v693 = vadd.f32 %v543, %v692
        %v694 = vpop.f32.mrb[0].mxu0
        %v695 = vadd.f32 %v548, %v694
        %v696 = vpop.f32.mrb[0].mxu0
        %v697 = vadd.f32 %v548, %v696
        %698 = vdwg.mxu0
        %v699 = vmax.f32 %v691, 0.0
        %v700 = vmax.f32 %v693, 0.0
        %v701 = vmax.f32 %v695, 0.0
        %v702 = vmax.f32 %v697, 0.0
        %v703 = vpack.c.bf16 %v701, %v699
        %v704 = vpack.c.bf16 %v702, %v700
        %v705 = vmul.bf16 %v703, %v372
        %v706 = vmul.bf16 %v704, %v370
        %v707 = vmul.bf16 %v703, %v400
        %v708 = vmul.bf16 %v704, %v398
        %v709 = vmul.bf16 %v703, %v412
        %v710 = vmul.bf16 %v704, %v410
        %v711 = vmul.bf16 %v703, %v420
        %v712 = vmul.bf16 %v704, %v424
        %v713 = vmul.bf16 %v703, %v432
        %v714 = vmul.bf16 %v704, %v436
        %v715 = vmul.bf16 %v703, %v444
        %v716 = vmul.bf16 %v704, %v448
        %719 = vrot.lane.b32.xlu0 %v703, 127
        %v720 = vpop.permute.xlu0 %719
        %721 = vrot.lane.b32.xlu0 %v704, 127
        %v722 = vpop.permute.xlu0 %721
        %v723 = vsel %vm411, %v457, %v720
        %v724 = vsel %vm411, %v720, %v722
        %727 = vrot.lane.b32.xlu0 %v707, 126
        %v728 = vpop.permute.xlu0 %727
        %729 = vrot.lane.b32.xlu0 %v708, 126
        %v730 = vpop.permute.xlu0 %729
        %v731 = vsel %vm473, %v468, %v728
        %v732 = vsel %vm473, %v728, %v730
        %735 = vrot.lane.b32.xlu0 %v709, 112
        %v736 = vpop.permute.xlu0 %735
        %737 = vrot.lane.b32.xlu0 %v710, 112
        %v738 = vpop.permute.xlu0 %737
        %v739 = vsel %vm485, %v480, %v736
        %v740 = vsel %vm485, %v736, %v738
        %741 = vrot.lane.b32.xlu0 %v703, 111
        %v742 = vpop.permute.xlu0 %741
        %743 = vrot.lane.b32.xlu0 %v704, 111
        %v744 = vpop.permute.xlu0 %743
        %v745 = vsel %vm371, %v742, %v744
        %748 = vrot.lane.b32.xlu0 %v711, 110
        %v749 = vpop.permute.xlu0 %748
        %750 = vrot.lane.b32.xlu0 %v712, 110
        %v751 = vpop.permute.xlu0 %750
        %v752 = vsel %vm502, %v749, %v751
        %v753 = vsel %vm502, %v751, %v501
        %756 = vrot.lane.b32.xlu0 %v713, 96
        %v757 = vpop.permute.xlu0 %756
        %758 = vrot.lane.b32.xlu0 %v714, 96
        %v759 = vpop.permute.xlu0 %758
        %v760 = vsel %vm514, %v757, %v759
        %v761 = vsel %vm514, %v759, %v513
        %762 = vrot.lane.b32.xlu0 %v703, 95
        %v763 = vpop.permute.xlu0 %762
        %764 = vrot.lane.b32.xlu0 %v704, 95
        %v765 = vpop.permute.xlu0 %764
        %v766 = vsel %vm523, %v763, %v765
        %v767 = vsel %vm523, %v765, %v522
        %770 = vrot.lane.b32.xlu0 %v715, 94
        %v771 = vpop.permute.xlu0 %770
        %772 = vrot.lane.b32.xlu0 %v716, 94
        %v773 = vpop.permute.xlu0 %772
        %v774 = vsel %vm535, %v771, %v773
        %v775 = vsel %vm535, %v773, %v534
        %v776 = vld [vmem:[#allocation5] sm:$0xff]
        %v777 = vld [vmem:[#allocation5 + $0x8] sm:$0xff]
        %778 = vset.pattern.permute.xlu0 1
        %779 = vperm.xlu0 %778, %v315
        %v780 = vpop.permute.xlu0 %779
        %782 = vset.pattern.permute.xlu0 1
        %783 = vperm.xlu0 %782, %v316
        %v784 = vpop.permute.xlu0 %783
        %v788 = vunpack.c.l.b16 %v776
        %v789 = vunpack.c.h.b16 %v776
        %v790 = vunpack.c.l.b16 %v777
        %v791 = vunpack.c.h.b16 %v777
        %v792 = vpack.c.b16 %v790, %v788
        %v793 = vpack.c.b16 %v791, %v789
        %797 = vrot.lane.b32.xlu0 %v705, 17
        %v798 = vpop.permute.xlu0 %797
        %799 = vrot.lane.b32.xlu0 %v706, 17
        %v800 = vpop.permute.xlu0 %799
        %801 = vrot.lane.b32.xlu0 %v723, 17
        %v802 = vpop.permute.xlu0 %801
        %803 = vrot.lane.b32.xlu0 %v724, 17
        %v804 = vpop.permute.xlu0 %803
        %805 = vrot.lane.b32.xlu0 %v722, 17
        %v806 = vpop.permute.xlu0 %805
        %807 = vrot.lane.b32.xlu0 %v731, 17
        %v808 = vpop.permute.xlu0 %807
        %809 = vrot.lane.b32.xlu0 %v732, 17
        %v810 = vpop.permute.xlu0 %809
        %811 = vrot.lane.b32.xlu0 %v730, 17
        %v812 = vpop.permute.xlu0 %811
        %813 = vrot.lane.b32.xlu0 %v739, 17
        %v814 = vpop.permute.xlu0 %813
        %815 = vrot.lane.b32.xlu0 %v740, 17
        %v816 = vpop.permute.xlu0 %815
        %817 = vrot.lane.b32.xlu0 %v738, 17
        %v818 = vpop.permute.xlu0 %817
        %819 = vrot.lane.b32.xlu0 %v742, 17
        %v820 = vpop.permute.xlu0 %819
        %821 = vrot.lane.b32.xlu0 %v745, 17
        %v822 = vpop.permute.xlu0 %821
        %823 = vrot.lane.b32.xlu0 %v744, 17
        %v824 = vpop.permute.xlu0 %823
        %825 = vrot.lane.b32.xlu0 %v749, 17
        %v826 = vpop.permute.xlu0 %825
        %827 = vrot.lane.b32.xlu0 %v752, 17
        %v828 = vpop.permute.xlu0 %827
        %829 = vrot.lane.b32.xlu0 %v753, 17
        %v830 = vpop.permute.xlu0 %829
        %831 = vrot.lane.b32.xlu0 %v757, 17
        %v832 = vpop.permute.xlu0 %831
        %833 = vrot.lane.b32.xlu0 %v760, 17
        %v834 = vpop.permute.xlu0 %833
        %835 = vrot.lane.b32.xlu0 %v761, 17
        %v836 = vpop.permute.xlu0 %835
        %837 = vrot.lane.b32.xlu0 %v763, 17
        %v838 = vpop.permute.xlu0 %837
        %839 = vrot.lane.b32.xlu0 %v766, 17
        %v840 = vpop.permute.xlu0 %839
        %841 = vrot.lane.b32.xlu0 %v767, 17
        %v842 = vpop.permute.xlu0 %841
        %843 = vrot.lane.b32.xlu0 %v771, 17
        %v844 = vpop.permute.xlu0 %843
        %845 = vrot.lane.b32.xlu0 %v774, 17
        %v846 = vpop.permute.xlu0 %845
        %847 = vrot.lane.b32.xlu0 %v775, 17
        %v848 = vpop.permute.xlu0 %847
        %v849 = vsel %vm447, %v563, %v798
        %v850 = vsel %vm447, %v798, %v800
        %v851 = vsel %vm447, %v802, %v804
        %v852 = vsel %vm447, %v804, %v806
        %v853 = vsel %vm447, %v808, %v810
        %v854 = vsel %vm447, %v810, %v812
        %v855 = vsel %vm447, %v814, %v816
        %v856 = vsel %vm447, %v816, %v818
        %v857 = vsel %vm447, %v820, %v822
        %v858 = vsel %vm447, %v822, %v824
        %v859 = vsel %vm447, %v826, %v828
        %v860 = vsel %vm447, %v828, %v830
        %v861 = vsel %vm447, %v832, %v834
        %v862 = vsel %vm447, %v834, %v836
        %v863 = vsel %vm447, %v838, %v840
        %v864 = vsel %vm447, %v840, %v842
        %v865 = vsel %vm447, %v844, %v846
        %v866 = vsel %vm447, %v846, %v848
        %v886 = vsel %vm652, %v793, 0
        %888 = vmatprep.subr.bf16.mxu0 %v850
        %889 = vmatpush1.bf16.msra.mxu0 %v849
        %890 = vmatprep.subr.bf16.mxu0 %v852
        %891 = vmatpush1.bf16.msra.mxu0 %v851
        %892 = vmatprep.subr.bf16.mxu0 %v854
        %893 = vmatpush1.bf16.msra.mxu0 %v853
        %894 = vmatprep.subr.bf16.mxu0 %v856
        %895 = vmatpush1.bf16.msra.mxu0 %v855
        %896 = vmatprep.subr.bf16.mxu0 %v858
        %897 = vmatpush1.bf16.msra.mxu0 %v857
        %898 = vmatprep.subr.bf16.mxu0 %v860
        %899 = vmatpush1.bf16.msra.mxu0 %v859
        %900 = vmatprep.subr.bf16.mxu0 %v862
        %901 = vmatpush1.bf16.msra.mxu0 %v861
        %902 = vmatprep.subr.bf16.mxu0 %v864
        %903 = vmatpush1.bf16.msra.mxu0 %v863
        %904 = vmatprep.subr.bf16.mxu0 %v866
        %905 = vmatpush1.bf16.msra.mxu0 %v865
        %906 = vmatprep.subr.bf16.mxu0 0
        %907 = vmatpush1.bf16.msra.mxu0 0
        %908 = vmatprep.subr.bf16.mxu0 0
        %909 = vmatpush1.bf16.msra.mxu0 0
        %910 = vmatprep.subr.bf16.mxu0 0
        %911 = vmatpush1.bf16.msra.mxu0 0
        %912 = vmatprep.subr.bf16.mxu0 0
        %913 = vmatpush1.bf16.msra.mxu0 0
        %914 = vmatprep.subr.bf16.mxu0 0
        %915 = vmatpush1.bf16.msra.mxu0 0
        %916 = vmatprep.subr.bf16.mxu0 0
        %917 = vmatpush1.bf16.msra.mxu0 0
        %918 = vmatprep.subr.bf16.mxu0 0
        %919 = vmatpush1.bf16.msra.mxu0 0
        %920 = vmatprep.mubr.bf16.mxu0 %v886
        %921 = vmatmul.mubr.bf16.gmra.mrb[0].mxu0 %v792
        %v922 = vpop.f32.mrb[0].mxu0
        %v923 = vadd.f32 %v780, %v922
        %v924 = vpop.f32.mrb[0].mxu0
        %v925 = vadd.f32 %v780, %v924
        %v926 = vpop.f32.mrb[0].mxu0
        %v927 = vadd.f32 %v784, %v926
        %v928 = vpop.f32.mrb[0].mxu0
        %v929 = vadd.f32 %v784, %v928
        %930 = vdwg.mxu0
        %v931 = vld [vmem:[%s4] sm:$0xf]
        %v932 = vld [vmem:[%s4 + $0x4] sm:$0xf]
        %933 = vset.pattern.permute.xlu0 2
        %934 = vperm.xlu0 %933, %v315
        %v935 = vpop.permute.xlu0 %934
        %937 = vset.pattern.permute.xlu0 2
        %938 = vperm.xlu0 %937, %v316
        %v939 = vpop.permute.xlu0 %938
        %v943 = vunpack.c.l.b16 %v931
        %v944 = vunpack.c.l.b16 %v932
        %v945 = vpack.c.b16 %v944, %v943
        %v947 = vsel %vm652, %v945, 0
        %949 = vmatprep.subr.bf16.mxu0 %v325
        %950 = vmatpush1.bf16.msra.mxu0 %v324
        %951 = vmatprep.subr.bf16.mxu0 0
        %952 = vmatpush1.bf16.msra.mxu0 0
        %953 = vmatprep.subr.bf16.mxu0 0
        %954 = vmatpush1.bf16.msra.mxu0 0
        %955 = vmatprep.subr.bf16.mxu0 0
        %956 = vmatpush1.bf16.msra.mxu0 0
        %957 = vmatprep.subr.bf16.mxu0 0
        %958 = vmatpush1.bf16.msra.mxu0 0
        %959 = vmatprep.subr.bf16.mxu0 0
        %960 = vmatpush1.bf16.msra.mxu0 0
        %961 = vmatprep.subr.bf16.mxu0 0
        %962 = vmatpush1.bf16.msra.mxu0 0
        %963 = vmatprep.subr.bf16.mxu0 0
        %964 = vmatpush1.bf16.msra.mxu0 0
        %965 = vmatprep.subr.bf16.mxu0 0
        %966 = vmatpush1.bf16.msra.mxu0 0
        %967 = vmatprep.subr.bf16.mxu0 0
        %968 = vmatpush1.bf16.msra.mxu0 0
        %969 = vmatprep.subr.bf16.mxu0 0
        %970 = vmatpush1.bf16.msra.mxu0 0
        %971 = vmatprep.subr.bf16.mxu0 0
        %972 = vmatpush1.bf16.msra.mxu0 0
        %973 = vmatprep.subr.bf16.mxu0 0
        %974 = vmatpush1.bf16.msra.mxu0 0
        %975 = vmatprep.subr.bf16.mxu0 0
        %976 = vmatpush1.bf16.msra.mxu0 0
        %977 = vmatprep.subr.bf16.mxu0 0
        %978 = vmatpush1.bf16.msra.mxu0 0
        %979 = vmatprep.subr.bf16.mxu0 0
        %980 = vmatpush1.bf16.msra.mxu0 0
        %981 = vmatprep.mubr.bf16.mxu0 0
        %982 = vmatmul.mubr.bf16.gmra.mrb[0].mxu0 %v947
        %v983 = vpop.f32.mrb[0].mxu0
        %v984 = vadd.f32 %v935, %v983
        %v985 = vpop.f32.mrb[0].mxu0
        %v986 = vadd.f32 %v935, %v985
        %v987 = vpop.f32.mrb[0].mxu0
        %v988 = vadd.f32 %v939, %v987
        %v989 = vpop.f32.mrb[0].mxu0
        %v990 = vadd.f32 %v939, %v989
        %991 = vdwg.mxu0
        %v992 = vadd.f32 %v984, %v923
        %v993 = vadd.f32 %v986, %v925
        %v994 = vadd.f32 %v988, %v927
        %v995 = vadd.f32 %v990, %v929
        %v996 = vmax.f32 %v992, 0.0
        %v997 = vmax.f32 %v993, 0.0
        %v998 = vmax.f32 %v994, 0.0
        %v999 = vmax.f32 %v995, 0.0
        %v1000 = vld [vmem:[%s5] sm:$0xf]
        %v1001 = vpack.c.bf16 %v998, %v996
        %v1002 = vpack.c.bf16 %v999, %v997
        %v1004 = vsel %vm652, %v1000, 0
        %1006 = vmatprep.subr.bf16.mxu0 %v1002
        %1007 = vmatpush1.bf16.msra.mxu0 %v1001
        %1008 = vmatprep.subr.bf16.mxu0 0
        %1009 = vmatpush1.bf16.msra.mxu0 0
        %1010 = vmatprep.subr.bf16.mxu0 0
        %1011 = vmatpush1.bf16.msra.mxu0 0
        %1012 = vmatprep.subr.bf16.mxu0 0
        %1013 = vmatpush1.bf16.msra.mxu0 0
        %1014 = vmatprep.subr.bf16.mxu0 0
        %1015 = vmatpush1.bf16.msra.mxu0 0
        %1016 = vmatprep.subr.bf16.mxu0 0
        %1017 = vmatpush1.bf16.msra.mxu0 0
        %1018 = vmatprep.subr.bf16.mxu0 0
        %1019 = vmatpush1.bf16.msra.mxu0 0
        %1020 = vmatprep.subr.bf16.mxu0 0
        %1021 = vmatpush1.bf16.msra.mxu0 0
        %1022 = vmatprep.subr.bf16.mxu0 0
        %1023 = vmatpush1.bf16.msra.mxu0 0
        %1024 = vmatprep.subr.bf16.mxu0 0
        %1025 = vmatpush1.bf16.msra.mxu0 0
        %1026 = vmatprep.subr.bf16.mxu0 0
        %1027 = vmatpush1.bf16.msra.mxu0 0
        %1028 = vmatprep.subr.bf16.mxu0 0
        %1029 = vmatpush1.bf16.msra.mxu0 0
        %1030 = vmatprep.subr.bf16.mxu0 0
        %1031 = vmatpush1.bf16.msra.mxu0 0
        %1032 = vmatprep.subr.bf16.mxu0 0
        %1033 = vmatpush1.bf16.msra.mxu0 0
        %1034 = vmatprep.subr.bf16.mxu0 0
        %1035 = vmatpush1.bf16.msra.mxu0 0
        %1036 = vmatprep.subr.bf16.mxu0 0
        %1037 = vmatpush1.bf16.msra.mxu0 0
        %1038 = vmatprep.mubr.bf16.mxu0 0
        %1039 = vmatmul.mubr.bf16.gmra.mrb[0].mxu0 %v1004
        %v1040 = vpop.f32.mrb[0].mxu0
        %v1041 = vadd.f32 0.0, %v1040
        %v1042 = vpop.f32.mrb[0].mxu0
        %v1043 = vadd.f32 0.0, %v1042
        %v1044 = vpop.f32.mrb[0].mxu0
        %v1045 = vpop.f32.mrb[0].mxu0
        %1046 = vdwg.mxu0
        %1047 = vst [vmem:[%s311] sm:$0xff] %v1041
        %1048 = vst [vmem:[%s311 + $0x8] sm:$0xff] %v1043
        %s1049 = sand.u32 %s185, 1
        %s1050 = scalar_lea.sflag [#allocation4], %s1049
        %s1051 = sand.u32 %s185, 1
        %s1052 = smul.addr %s1051, 16
        %s1053 = scalar_lea.vmem [#allocation7], %s1052
        // Predicated region
        $region57: #{tpu_custom_call.1} parent=47 // pred_check
          %p1054 = pneg %p195
        $region58: #{tpu_custom_call.1} parent=47 // pred_check_branch
          %1056 = sbr.rel (%p1054) target = $region60
        $region59: #{tpu_custom_call.1} parent=47 // pred_region
          %s1058 = ssub.s32 256, 256
          %1059 = vsyncadd %s1050, %s1058
          %s1060 = smul.addr %s25, 2
          %s1061 = smul.addr %s1060, 128
          %s1062 = scalar_lea.hbm %s7, %s1061
          %s1064 = sshll.u32 %s1053, 4
          %s1065 = int_to_ptr.vmem [resolvable:$true] %s1064
          %1067 = dma.vmem_to_hbm [thread:$0]  %s1065, 256, %s1062, %s1050
        $region60: #{tpu_custom_call.1} parent=47 // pred_fallthru
          _
      $region48: #{tpu_custom_call.1} parent=5 // pred_fallthru
        _
      %p1068 = scmp.le.s32.totalorder 2, %s20
      // Predicated region
      $region61: #{tpu_custom_call.1} parent=5 // pred_check
        %p1069 = pneg %p1068
      $region62: #{tpu_custom_call.1} parent=5 // pred_check_branch
        %1071 = sbr.rel (%p1069) target = $region64
      $region63: #{tpu_custom_call.1} parent=5 // pred_region
        %s1072 = ssub.s32 %s20, 2
        // Predicated region
        $region65: #{tpu_custom_call.1} parent=63 // pred_check
          %p1073 = pneg %p201
        $region66: #{tpu_custom_call.1} parent=63 // pred_check_branch
          %1075 = sbr.rel (%p1073) target = $region68
        $region67: #{tpu_custom_call.1} parent=63 // pred_region
          %s1076 = sand.u32 %s186, 1
          %s1077 = scalar_lea.sflag [#allocation4], %s1076
          %s1078 = sand.u32 %s186, 1
          %s1079 = smul.addr %s1078, 16
          %s1080 = scalar_lea.vmem [#allocation7], %s1079
          %1081 = dma.done %s1077, 256
        $region68: #{tpu_custom_call.1} parent=63 // pred_fallthru
          _
      $region64: #{tpu_custom_call.1} parent=5 // pred_fallthru
        _
    $region6: #{tpu_custom_call.1} parent=1 // loop_footer
      %s24 = sadd.s32 1, %s20
    $region7: #{tpu_custom_call.1} parent=1 // loop_footer_branch
      %19 = sbr.rel target = $region3
    $region8: #{tpu_custom_call.1} parent=1 // loop_exit
      _
    %1082 = vsyncpa [#allocation3], 1
    %s1083 = scalar_lea.sflag [#allocation3], 1
    %1084 = vsyncpa %s1083, 1
    %1085 = vsyncpa [#allocation6], 1
    %1086 = vsyncpa [#allocation4], 1
    %s1087 = scalar_lea.sflag [#allocation4], 1
    %1088 = vsyncpa %s1087, 1

// kernel: tpu_custom_call.1
$region0: #{tpu_custom_call.1}
  #allocation0 [shape = 'u32[]', space=smem, size = 0x4, offset = 0x4, fixed_abs, tag = 'smem constant byte address 0x4 - core index']
  #allocation1 [shape = 'u32[144,128]{1,0:T(1,128)}', space=vmem, size = 0x12000, scoped, tag = 'internal scratch']
  %s0 = inlined_call_operand.hbm [shape: bf16[2,16,256], index: 0, kind: input, shape index: {}]
  %s1 = inlined_call_operand.vmem [shape: bf16[2,256], index: 1, kind: input, shape index: {}]
  %s2 = inlined_call_operand.vmem [shape: bf16[16,144], index: 2, kind: input, shape index: {}]
  %s3 = inlined_call_operand.hbm [shape: bf16[16,144], index: 3, kind: input, shape index: {}]
  %s4 = inlined_call_operand.vmem [shape: bf16[16,16], index: 4, kind: input, shape index: {}]
  %s5 = inlined_call_operand.vmem [shape: bf16[8,16], index: 5, kind: input, shape index: {}]
  %s6 = inlined_call_operand.vmem [shape: f32[16,3], index: 6, kind: input, shape index: {}]
  %s7 = inlined_call_operand.hbm [shape: f32[2,8,256], index: 7, kind: output, shape index: {}]
  %s8 = sld [smem:[#allocation0]]
  $region69: #{tpu_custom_call.1} parent=0
    _
  %s10 = ssub.s32 1, %s8
  %s11 = scalar_select 0, %s10, %s8
  $region1: #{tpu_custom_call.1} parent=0
    #allocation2 [shape = 'u8[16384]{0}', space=vmem, size = 0x4000, scoped, tag = 'input window, operand 0']
    #allocation3 [shape = 's32[2]{0}', space=sflag, size = 0x8, scoped, tag = 'scoped memory for tpu_custom_call.1']
    #allocation4 [shape = 's32[2]{0}', space=sflag, size = 0x8, scoped, tag = 'scoped memory for tpu_custom_call.1']
    #allocation5 [shape = 'u8[8192]{0}', space=vmem, size = 0x2000, scoped, tag = 'input window, operand 3, single buffered']
    #allocation6 [shape = 's32[1]{0}', space=sflag, size = 0x4, scoped, tag = 'scoped memory for tpu_custom_call.1']
    #allocation7 [shape = 'u8[16384]{0}', space=vmem, size = 0x4000, scoped, tag = 'output window, operand 0']
    %12 = vsyncpa [#allocation3], 0
    %s13 = scalar_lea.sflag [#allocation3], 1
    %14 = vsyncpa %s13, 0
    %15 = vsyncpa [#allocation6], 0
    %16 = vsyncpa [#allocation4], 0
    %s17 = scalar_lea.sflag [#allocation4], 1
    %18 = vsyncpa %s17, 0
    loop: start=0, step=1, limit=4
    $region2: #{tpu_custom_call.1} parent=1 // loop_pre_header
      _
    $region3: #{tpu_custom_call.1} parent=1 // loop_header
      %s20 = sphi 0, %s24
      %p21 = scmp.ge.s32.totalorder %s20, 4
      %s30 = sphi 0, %s32
      %s33 = sphi 0, %s30
      %s34 = sphi 0, %s33
      %s50 = sphi 0, %s34
      %s54 = sphi 0, %s54
      %s56 = sphi 0, %s54
      %s57 = sphi 0, %s56
      %s71 = sphi 0, %s57
      %s75 = sphi 0, %s75
      %s77 = sphi 0, %s75
      %s78 = sphi 0, %s77
      %s92 = sphi 0, %s78
      %s96 = sphi 0, %s96
      %s98 = sphi 0, %s96
      %s99 = sphi 0, %s98
      %s113 = sphi 0, %s99
      %s117 = sphi 0, %s117
      %s119 = sphi 0, %s117
      %s120 = sphi 0, %s119
      %s134 = sphi 0, %s120
      %s138 = sphi 0, %s138
      %s140 = sphi 0, %s138
      %s141 = sphi 0, %s140
      %s155 = sphi 0, %s141
      %s159 = sphi 0, %s159
      %s161 = sphi 0, %s159
      %s162 = sphi 0, %s161
      %s176 = sphi 0, %s162
      %s182 = sphi 0, %s184
      %s185 = sphi 0, %s182
      %s186 = sphi 0, %s185
      %s202 = sphi 0, %s186
    $region4: #{tpu_custom_call.1} parent=1 // loop_header_branch
      %23 = sbr.rel (%p21) target = $region8
    $region5: #{tpu_custom_call.1} parent=1 // loop_body
      %s25 = ssub.s32 %s20, 1
      %s26 = ssub.s32 %s20, 2
      %s27 = sadd.s32 %s20, 1
      %s28 = ssub.s32 %s20, %s27
      %p29 = scmp.eq.s32.totalorder %s28, 0
      %s31 = sadd.s32 %s30, 1
      %s32 = scalar_select %p29, %s30, %s31
      %p35 = pneg %p29
      %p36 = scmp.eq.s32.totalorder %s20, 1
      %p37 = por %p35, %p36
      %p38 = scmp.ne.s32.totalorder %s30, %s33
      %p39 = scmp.eq.s32.totalorder %s20, 0
      %p40 = por %p38, %p39
      %p41 = scmp.ne.s32.totalorder %s30, %s33
      %p42 = scmp.eq.s32.totalorder %s25, 1
      %p43 = por %p41, %p42
      %p44 = scmp.ne.s32.totalorder %s33, %s34
      %p45 = scmp.eq.s32.totalorder %s25, 0
      %p46 = por %p44, %p45
      %p47 = scmp.ne.s32.totalorder %s33, %s34
      %p48 = scmp.eq.s32.totalorder %s26, 1
      %p49 = por %p47, %p48
      %p51 = scmp.ne.s32.totalorder %s34, %s50
      %p52 = scmp.eq.s32.totalorder %s26, 0
      %p53 = por %p51, %p52
      %s55 = sadd.s32 %s54, 1
      %p58 = scmp.eq.s32.totalorder %s20, 1
      %p59 = scmp.ne.s32.totalorder %s54, %s56
      %p60 = scmp.eq.s32.totalorder %s20, 0
      %p61 = por %p59, %p60
      %p62 = scmp.ne.s32.totalorder %s54, %s56
      %p63 = scmp.eq.s32.totalorder %s25, 1
      %p64 = por %p62, %p63
      %p65 = scmp.ne.s32.totalorder %s56, %s57
      %p66 = scmp.eq.s32.totalorder %s25, 0
      %p67 = por %p65, %p66
      %p68 = scmp.ne.s32.totalorder %s56, %s57
      %p69 = scmp.eq.s32.totalorder %s26, 1
      %p70 = por %p68, %p69
      %p72 = scmp.ne.s32.totalorder %s57, %s71
      %p73 = scmp.eq.s32.totalorder %s26, 0
      %p74 = por %p72, %p73
      %s76 = sadd.s32 %s75, 1
      %p79 = scmp.eq.s32.totalorder %s20, 1
      %p80 = scmp.ne.s32.totalorder %s75, %s77
      %p81 = scmp.eq.s32.totalorder %s20, 0
      %p82 = por %p80, %p81
      %p83 = scmp.ne.s32.totalorder %s75, %s77
      %p84 = scmp.eq.s32.totalorder %s25, 1
      %p85 = por %p83, %p84
      %p86 = scmp.ne.s32.totalorder %s77, %s78
      %p87 = scmp.eq.s32.totalorder %s25, 0
      %p88 = por %p86, %p87
      %p89 = scmp.ne.s32.totalorder %s77, %s78
      %p90 = scmp.eq.s32.totalorder %s26, 1
      %p91 = por %p89, %p90
      %p93 = scmp.ne.s32.totalorder %s78, %s92
      %p94 = scmp.eq.s32.totalorder %s26, 0
      %p95 = por %p93, %p94
      %s97 = sadd.s32 %s96, 1
      %p100 = scmp.eq.s32.totalorder %s20, 1
      %p101 = scmp.ne.s32.totalorder %s96, %s98
      %p102 = scmp.eq.s32.totalorder %s20, 0
      %p103 = por %p101, %p102
      %p104 = scmp.ne.s32.totalorder %s96, %s98
      %p105 = scmp.eq.s32.totalorder %s25, 1
      %p106 = por %p104, %p105
      %p107 = scmp.ne.s32.totalorder %s98, %s99
      %p108 = scmp.eq.s32.totalorder %s25, 0
      %p109 = por %p107, %p108
      %p110 = scmp.ne.s32.totalorder %s98, %s99
      %p111 = scmp.eq.s32.totalorder %s26, 1
      %p112 = por %p110, %p111
      %p114 = scmp.ne.s32.totalorder %s99, %s113
      %p115 = scmp.eq.s32.totalorder %s26, 0
      %p116 = por %p114, %p115
      %s118 = sadd.s32 %s117, 1
      %p121 = scmp.eq.s32.totalorder %s20, 1
      %p122 = scmp.ne.s32.totalorder %s117, %s119
      %p123 = scmp.eq.s32.totalorder %s20, 0
      %p124 = por %p122, %p123
      %p125 = scmp.ne.s32.totalorder %s117, %s119
      %p126 = scmp.eq.s32.totalorder %s25, 1
      %p127 = por %p125, %p126
      %p128 = scmp.ne.s32.totalorder %s119, %s120
      %p129 = scmp.eq.s32.totalorder %s25, 0
      %p130 = por %p128, %p129
      %p131 = scmp.ne.s32.totalorder %s119, %s120
      %p132 = scmp.eq.s32.totalorder %s26, 1
      %p133 = por %p131, %p132
      %p135 = scmp.ne.s32.totalorder %s120, %s134
      %p136 = scmp.eq.s32.totalorder %s26, 0
      %p137 = por %p135, %p136
      %s139 = sadd.s32 %s138, 1
      %p142 = scmp.eq.s32.totalorder %s20, 1
      %p143 = scmp.ne.s32.totalorder %s138, %s140
      %p144 = scmp.eq.s32.totalorder %s20, 0
      %p145 = por %p143, %p144
      %p146 = scmp.ne.s32.totalorder %s138, %s140
      %p147 = scmp.eq.s32.totalorder %s25, 1
      %p148 = por %p146, %p147
      %p149 = scmp.ne.s32.totalorder %s140, %s141
      %p150 = scmp.eq.s32.totalorder %s25, 0
      %p151 = por %p149, %p150
      %p152 = scmp.ne.s32.totalorder %s140, %s141
      %p153 = scmp.eq.s32.totalorder %s26, 1
      %p154 = por %p152, %p153
      %p156 = scmp.ne.s32.totalorder %s141, %s155
      %p157 = scmp.eq.s32.totalorder %s26, 0
      %p158 = por %p156, %p157
      %s160 = sadd.s32 %s159, 1
      %p163 = scmp.eq.s32.totalorder %s20, 1
      %p164 = scmp.ne.s32.totalorder %s159, %s161
      %p165 = scmp.eq.s32.totalorder %s20, 0
      %p166 = por %p164, %p165
      %p167 = scmp.ne.s32.totalorder %s159, %s161
      %p168 = scmp.eq.s32.totalorder %s25, 1
      %p169 = por %p167, %p168
      %p170 = scmp.ne.s32.totalorder %s161, %s162
      %p171 = scmp.eq.s32.totalorder %s25, 0
      %p172 = por %p170, %p171
      %p173 = scmp.ne.s32.totalorder %s161, %s162
      %p174 = scmp.eq.s32.totalorder %s26, 1
      %p175 = por %p173, %p174
      %p177 = scmp.ne.s32.totalorder %s162, %s176
      %p178 = scmp.eq.s32.totalorder %s26, 0
      %p179 = por %p177, %p178
      %s180 = ssub.s32 %s20, %s27
      %p181 = scmp.eq.s32.totalorder %s180, 0
      %s183 = sadd.s32 %s182, 1
      %s184 = scalar_select %p181, %s182, %s183
      %p187 = pneg %p181
      %p188 = scmp.eq.s32.totalorder %s20, 1
      %p189 = por %p187, %p188
      %p190 = scmp.ne.s32.totalorder %s182, %s185
      %p191 = scmp.eq.s32.totalorder %s20, 0
      %p192 = por %p190, %p191
      %p193 = scmp.ne.s32.totalorder %s182, %s185
      %p194 = scmp.eq.s32.totalorder %s25, 1
      %p195 = por %p193, %p194
      %p196 = scmp.ne.s32.totalorder %s185, %s186
      %p197 = scmp.eq.s32.totalorder %s25, 0
      %p198 = por %p196, %p197
      %p199 = scmp.ne.s32.totalorder %s185, %s186
      %p200 = scmp.eq.s32.totalorder %s26, 1
      %p201 = por %p199, %p200
      %p203 = scmp.ne.s32.totalorder %s186, %s202
      %p204 = scmp.eq.s32.totalorder %s26, 0
      %p205 = por %p203, %p204
      %p206 = scmp.le.s32.totalorder 1, %s20
      %p207 = scmp.lt.s32.totalorder %s20, 3
      %p208 = pnand %p206, %p207
      %p209 = pneg %p208
      // Predicated region
      $region9: #{tpu_custom_call.1} parent=5 // pred_check
        _
      $region10: #{tpu_custom_call.1} parent=5 // pred_check_branch
        %211 = sbr.rel (%p208) target = $region12
      $region11: #{tpu_custom_call.1} parent=5 // pred_region
        %s212 = ssub.s32 %s20, 1
        // Predicated region
        $region13: #{tpu_custom_call.1} parent=11 // pred_check
          %p213 = pneg %p67
        $region14: #{tpu_custom_call.1} parent=11 // pred_check_branch
          %215 = sbr.rel (%p213) target = $region16
        $region15: #{tpu_custom_call.1} parent=11 // pred_region
          _
        $region16: #{tpu_custom_call.1} parent=11 // pred_fallthru
          _
        // Predicated region
        $region17: #{tpu_custom_call.1} parent=11 // pred_check
          %p216 = pneg %p88
        $region18: #{tpu_custom_call.1} parent=11 // pred_check_branch
          %218 = sbr.rel (%p216) target = $region20
        $region19: #{tpu_custom_call.1} parent=11 // pred_region
          _
        $region20: #{tpu_custom_call.1} parent=11 // pred_fallthru
          _
        // Predicated region
        $region21: #{tpu_custom_call.1} parent=11 // pred_check
          %p219 = pneg %p109
        $region22: #{tpu_custom_call.1} parent=11 // pred_check_branch
          %221 = sbr.rel (%p219) target = $region24
        $region23: #{tpu_custom_call.1} parent=11 // pred_region
          %s223 = ssub.s32 256, 256
          %224 = vsyncadd [#allocation6], %s223
          %s225 = sshll.u32 [#allocation5], 4
          %s226 = int_to_ptr.vmem [resolvable:$true] %s225
          %231 = dma.hbm_to_vmem [thread:$0]  %s3, 256, %s226, [#allocation6], 128, 128, 8
        $region24: #{tpu_custom_call.1} parent=11 // pred_fallthru
          _
        // Predicated region
        $region25: #{tpu_custom_call.1} parent=11 // pred_check
          %p232 = pneg %p130
        $region26: #{tpu_custom_call.1} parent=11 // pred_check_branch
          %234 = sbr.rel (%p232) target = $region28
        $region27: #{tpu_custom_call.1} parent=11 // pred_region
          _
        $region28: #{tpu_custom_call.1} parent=11 // pred_fallthru
          _
        // Predicated region
        $region29: #{tpu_custom_call.1} parent=11 // pred_check
          %p235 = pneg %p151
        $region30: #{tpu_custom_call.1} parent=11 // pred_check_branch
          %237 = sbr.rel (%p235) target = $region32
        $region31: #{tpu_custom_call.1} parent=11 // pred_region
          _
        $region32: #{tpu_custom_call.1} parent=11 // pred_fallthru
          _
        // Predicated region
        $region33: #{tpu_custom_call.1} parent=11 // pred_check
          %p238 = pneg %p172
        $region34: #{tpu_custom_call.1} parent=11 // pred_check_branch
          %240 = sbr.rel (%p238) target = $region36
        $region35: #{tpu_custom_call.1} parent=11 // pred_region
          _
        $region36: #{tpu_custom_call.1} parent=11 // pred_fallthru
          _
      $region12: #{tpu_custom_call.1} parent=5 // pred_fallthru
        _
      %p241 = scmp.lt.s32.totalorder %s20, 2
      // Predicated region
      $region37: #{tpu_custom_call.1} parent=5 // pred_check
        %p242 = pneg %p241
      $region38: #{tpu_custom_call.1} parent=5 // pred_check_branch
        %244 = sbr.rel (%p242) target = $region40
      $region39: #{tpu_custom_call.1} parent=5 // pred_region
        // Predicated region
        $region41: #{tpu_custom_call.1} parent=39 // pred_check
          %p245 = pneg %p40
        $region42: #{tpu_custom_call.1} parent=39 // pred_check_branch
          %247 = sbr.rel (%p245) target = $region44
        $region43: #{tpu_custom_call.1} parent=39 // pred_region
          %s248 = sand.u32 %s30, 1
          %s249 = scalar_lea.sflag [#allocation3], %s248
          %s250 = sand.u32 %s30, 1
          %s251 = smul.addr %s250, 16
          %s252 = scalar_lea.vmem [#allocation2], %s251
          %s254 = ssub.s32 256, 256
          %255 = vsyncadd %s249, %s254
          %s256 = smul.addr %s20, 4
          %s257 = smul.addr %s256, 64
          %s258 = scalar_lea.hbm %s0, %s257
          %s259 = sshll.u32 %s252, 4
          %s260 = int_to_ptr.vmem [resolvable:$true] %s259
          %265 = dma.hbm_to_vmem [thread:$0]  %s258, 256, %s260, %s249, 128, 128, 8
        $region44: #{tpu_custom_call.1} parent=39 // pred_fallthru
          _
      $region40: #{tpu_custom_call.1} parent=5 // pred_fallthru
        _
      %p266 = scmp.le.s32.totalorder 1, %s20
      %p267 = scmp.lt.s32.totalorder %s20, 3
      %p268 = pnand %p266, %p267
      %p269 = pneg %p268
      // Predicated region
      $region45: #{tpu_custom_call.1} parent=5 // pred_check
        _
      $region46: #{tpu_custom_call.1} parent=5 // pred_check_branch
        %271 = sbr.rel (%p268) target = $region48
      $region47: #{tpu_custom_call.1} parent=5 // pred_region
        %s272 = ssub.s32 %s20, 1
        %s273 = sand.u32 %s33, 1
        %s274 = scalar_lea.sflag [#allocation3], %s273
        %s275 = sand.u32 %s33, 1
        %s276 = smul.addr %s275, 16
        %s277 = scalar_lea.vmem [#allocation2], %s276
        // Predicated region
        $region49: #{tpu_custom_call.1} parent=47 // pred_check
          %p278 = pneg %p46
        $region50: #{tpu_custom_call.1} parent=47 // pred_check_branch
          %280 = sbr.rel (%p278) target = $region52
        $region51: #{tpu_custom_call.1} parent=47 // pred_region
          %281 = dma.done %s274, 256
        $region52: #{tpu_custom_call.1} parent=47 // pred_fallthru
          _
        // Predicated region
        $region53: #{tpu_custom_call.1} parent=47 // pred_check
          %p282 = pneg %p109
        $region54: #{tpu_custom_call.1} parent=47 // pred_check_branch
          %284 = sbr.rel (%p282) target = $region56
        $region55: #{tpu_custom_call.1} parent=47 // pred_region
          %285 = dma.done [#allocation6], 256
        $region56: #{tpu_custom_call.1} parent=47 // pred_fallthru
          _
        %s286 = sand.u32 %s33, 1
        %s287 = scalar_lea.sflag [#allocation3], %s286
        %s288 = sand.u32 %s33, 1
        %s289 = smul.addr %s288, 16
        %s290 = scalar_lea.vmem [#allocation2], %s289
        %p291 = pneg %p46
        %p292 = pneg %p43
        %p293 = pneg %p67
        %p294 = pneg %p64
        %p295 = pneg %p88
        %p296 = pneg %p85
        %p297 = pneg %p109
        %p298 = pneg %p106
        %p299 = pneg %p130
        %p300 = pneg %p127
        %p301 = pneg %p151
        %p302 = pneg %p148
        %p303 = pneg %p172
        %p304 = pneg %p169
        %p305 = pneg %p198
        %p306 = pneg %p195
        %s307 = sand.u32 %s185, 1
        %s308 = scalar_lea.sflag [#allocation4], %s307
        %s309 = sand.u32 %s185, 1
        %s310 = smul.addr %s309, 16
        %s311 = scalar_lea.vmem [#allocation7], %s310
        %v313 = vld [vmem:[%s277] sm:$0xff]
        %v314 = vld [vmem:[%s277 + $0x8] sm:$0xff]
        %v315 = vld [vmem:[%s6] sm:$0xff]
        %v316 = vld [vmem:[%s6 + $0x8] sm:$0xff]
        %v317 = vld [vmem:[%s1] sm:$0x3]
        %v320 = vunpack.c.l.b16 %v313
        %v321 = vunpack.c.h.b16 %v313
        %v322 = vunpack.c.l.b16 %v314
        %v323 = vunpack.c.h.b16 %v314
        %v324 = vpack.c.b16 %v322, %v320
        %v325 = vpack.c.b16 %v323, %v321
        %v330 = vunpack.c.l.s4 1966171168
        %v331 = vunpack.c.0.s8 %v330
        %v332 = vlaneseq
        %v333 = vshrl.u32 %v332, 7
        %v334 = vsub.s32 %v331, %v333
        %v335 = vrot.slane %v317, %v334
        %v336 = vcombine.high %v335, %v335
        %v338 = vunpack.c.l.s4 1966171168
        %v339 = vunpack.c.0.s8 %v338
        %v340 = vlaneseq
        %v341 = vshrl.u32 %v340, 7
        %v342 = vsub.s32 %v339, %v341
        %v343 = vrot.slane %v335, %v342
        %v345 = vunpack.c.l.s4 1966171168
        %v346 = vunpack.c.0.s8 %v345
        %v347 = vlaneseq
        %v348 = vshrl.u32 %v347, 7
        %v349 = vsub.s32 %v346, %v348
        %v350 = vrot.slane %v336, %v349
        %v352 = vpack.i.b16 %v343, %v343
        %v354 = vlaneseq
        %v355 = vshrl.u32 %v354, 7
        %v356 = vsub.s32 0, %v355
        %v357 = vrot.slane %v352, %v356
        %v359 = vpack.i.b16 %v350, %v350
        %v361 = vlaneseq
        %v362 = vshrl.u32 %v361, 7
        %v363 = vsub.s32 0, %v362
        %v364 = vrot.slane %v359, %v363
        %367 = vrot.lane.b32.xlu0 %v357, 111
        %v368 = vpop.permute.xlu0 %367
        %369 = vrot.lane.b32.xlu0 %v364, 111
        %v370 = vpop.permute.xlu0 %369
        %vm371 = vcmask 908288
        %v372 = vsel %vm371, %v368, %v370
        %v376 = vmul.bf16 %v368, 0
        %v377 = vmul.bf16 %v324, %v372
        %v378 = vmul.bf16 %v325, %v370
        %v379 = vshrl.u32 %v343, 16
        %v380 = vpack.i.b16 %v379, %v379
        %v382 = vlaneseq
        %v383 = vshrl.u32 %v382, 7
        %v384 = vsub.s32 0, %v383
        %v385 = vrot.slane %v380, %v384
        %v386 = vshrl.u32 %v350, 16
        %v387 = vpack.i.b16 %v386, %v386
        %v389 = vlaneseq
        %v390 = vshrl.u32 %v389, 7
        %v391 = vsub.s32 0, %v390
        %v392 = vrot.slane %v387, %v391
        %395 = vrot.lane.b32.xlu0 %v385, 113
        %v396 = vpop.permute.xlu0 %395
        %397 = vrot.lane.b32.xlu0 %v392, 113
        %v398 = vpop.permute.xlu0 %397
        %vm399 = vcmask 924672
        %v400 = vsel %vm399, %v396, %v398
        %v404 = vmul.bf16 %v396, 0
        %v405 = vmul.bf16 %v324, %v400
        %v406 = vmul.bf16 %v325, %v398
        %407 = vrot.lane.b32.xlu0 %v357, 127
        %v408 = vpop.permute.xlu0 %407
        %409 = vrot.lane.b32.xlu0 %v364, 127
        %v410 = vpop.permute.xlu0 %409
        %vm411 = vcmask 1039360
        %v412 = vsel %vm411, %v408, %v410
        %v416 = vmul.bf16 %v408, 0
        %v417 = vmul.bf16 %v324, %v412
        %v418 = vmul.bf16 %v325, %v410
        %419 = vrot.lane.b32.xlu0 %v385, 1
        %v420 = vpop.permute.xlu0 %419
        %421 = vrot.lane.b32.xlu0 %v392, 1
        %v422 = vpop.permute.xlu0 %421
        %vm423 = vcmask 7168
        %v424 = vsel %vm423, %v420, %v422
        %v428 = vmul.bf16 %v324, %v420
        %v429 = vmul.bf16 %v325, %v424
        %v430 = vmul.bf16 %v422, 0
        %431 = vrot.lane.b32.xlu0 %v357, 15
        %v432 = vpop.permute.xlu0 %431
        %433 = vrot.lane.b32.xlu0 %v364, 15
        %v434 = vpop.permute.xlu0 %433
        %vm435 = vcmask 121856
        %v436 = vsel %vm435, %v432, %v434
        %v440 = vmul.bf16 %v324, %v432
        %v441 = vmul.bf16 %v325, %v436
        %v442 = vmul.bf16 %v434, 0
        %443 = vrot.lane.b32.xlu0 %v385, 17
        %v444 = vpop.permute.xlu0 %443
        %445 = vrot.lane.b32.xlu0 %v392, 17
        %v446 = vpop.permute.xlu0 %445
        %vm447 = vcmask 138240
        %v448 = vsel %vm447, %v444, %v446
        %v452 = vmul.bf16 %v324, %v444
        %v453 = vmul.bf16 %v325, %v448
        %v454 = vmul.bf16 %v446, 0
        %456 = vrot.lane.b32.xlu0 0, 127
        %v457 = vpop.permute.xlu0 %456
        %458 = vrot.lane.b32.xlu0 %v324, 127
        %v459 = vpop.permute.xlu0 %458
        %460 = vrot.lane.b32.xlu0 %v325, 127
        %v461 = vpop.permute.xlu0 %460
        %v462 = vsel %vm411, %v457, %v459
        %v463 = vsel %vm411, %v459, %v461
        %467 = vrot.lane.b32.xlu0 %v404, 126
        %v468 = vpop.permute.xlu0 %467
        %469 = vrot.lane.b32.xlu0 %v405, 126
        %v470 = vpop.permute.xlu0 %469
        %471 = vrot.lane.b32.xlu0 %v406, 126
        %v472 = vpop.permute.xlu0 %471
        %vm473 = vcmask 1031168
        %v474 = vsel %vm473, %v468, %v470
        %v475 = vsel %vm473, %v470, %v472
        %479 = vrot.lane.b32.xlu0 %v416, 112
        %v480 = vpop.permute.xlu0 %479
        %481 = vrot.lane.b32.xlu0 %v417, 112
        %v482 = vpop.permute.xlu0 %481
        %483 = vrot.lane.b32.xlu0 %v418, 112
        %v484 = vpop.permute.xlu0 %483
        %vm485 = vcmask 916480
        %v486 = vsel %vm485, %v480, %v482
        %v487 = vsel %vm485, %v482, %v484
        %488 = vrot.lane.b32.xlu0 %v324, 111
        %v489 = vpop.permute.xlu0 %488
        %490 = vrot.lane.b32.xlu0 %v325, 111
        %v491 = vpop.permute.xlu0 %490
        %v492 = vsel %vm371, %v489, %v491
        %496 = vrot.lane.b32.xlu0 %v428, 110
        %v497 = vpop.permute.xlu0 %496
        %498 = vrot.lane.b32.xlu0 %v429, 110
        %v499 = vpop.permute.xlu0 %498
        %500 = vrot.lane.b32.xlu0 %v430, 110
        %v501 = vpop.permute.xlu0 %500
        %vm502 = vcmask 900096
        %v503 = vsel %vm502, %v497, %v499
        %v504 = vsel %vm502, %v499, %v501
        %508 = vrot.lane.b32.xlu0 %v440, 96
        %v509 = vpop.permute.xlu0 %508
        %510 = vrot.lane.b32.xlu0 %v441, 96
        %v511 = vpop.permute.xlu0 %510
        %512 = vrot.lane.b32.xlu0 %v442, 96
        %v513 = vpop.permute.xlu0 %512
        %vm514 = vcmask 785408
        %v515 = vsel %vm514, %v509, %v511
        %v516 = vsel %vm514, %v511, %v513
        %517 = vrot.lane.b32.xlu0 %v324, 95
        %v518 = vpop.permute.xlu0 %517
        %519 = vrot.lane.b32.xlu0 %v325, 95
        %v520 = vpop.permute.xlu0 %519
        %521 = vrot.lane.b32.xlu0 0, 95
        %v522 = vpop.permute.xlu0 %521
        %vm523 = vcmask 777216
        %v524 = vsel %vm523, %v518, %v520
        %v525 = vsel %vm523, %v520, %v522
        %529 = vrot.lane.b32.xlu0 %v452, 94
        %v530 = vpop.permute.xlu0 %529
        %531 = vrot.lane.b32.xlu0 %v453, 94
        %v532 = vpop.permute.xlu0 %531
        %533 = vrot.lane.b32.xlu0 %v454, 94
        %v534 = vpop.permute.xlu0 %533
        %vm535 = vcmask 769024
        %v536 = vsel %vm535, %v530, %v532
        %v537 = vsel %vm535, %v532, %v534
        %v538 = vld [vmem:[%s2] sm:$0xff]
        %v539 = vld [vmem:[%s2 + $0x8] sm:$0xff]
        %541 = vset.pattern.permute.xlu0 0
        %542 = vperm.xlu0 %541, %v315
        %v543 = vpop.permute.xlu0 %542
        %546 = vset.pattern.permute.xlu0 0
        %547 = vperm.xlu0 %546, %v316
        %v548 = vpop.permute.xlu0 %547
        %v552 = vunpack.c.l.b16 %v538
        %v553 = vunpack.c.h.b16 %v538
        %v554 = vunpack.c.l.b16 %v539
        %v555 = vunpack.c.h.b16 %v539
        %v556 = vpack.c.b16 %v554, %v552
        %v557 = vpack.c.b16 %v555, %v553
        %562 = vrot.lane.b32.xlu0 %v376, 17
        %v563 = vpop.permute.xlu0 %562
        %564 = vrot.lane.b32.xlu0 %v377, 17
        %v565 = vpop.permute.xlu0 %564
        %566 = vrot.lane.b32.xlu0 %v378, 17
        %v567 = vpop.permute.xlu0 %566
        %568 = vrot.lane.b32.xlu0 %v462, 17
        %v569 = vpop.permute.xlu0 %568
        %570 = vrot.lane.b32.xlu0 %v463, 17
        %v571 = vpop.permute.xlu0 %570
        %572 = vrot.lane.b32.xlu0 %v461, 17
        %v573 = vpop.permute.xlu0 %572
        %574 = vrot.lane.b32.xlu0 %v474, 17
        %v575 = vpop.permute.xlu0 %574
        %576 = vrot.lane.b32.xlu0 %v475, 17
        %v577 = vpop.permute.xlu0 %576
        %578 = vrot.lane.b32.xlu0 %v472, 17
        %v579 = vpop.permute.xlu0 %578
        %580 = vrot.lane.b32.xlu0 %v486, 17
        %v581 = vpop.permute.xlu0 %580
        %582 = vrot.lane.b32.xlu0 %v487, 17
        %v583 = vpop.permute.xlu0 %582
        %584 = vrot.lane.b32.xlu0 %v484, 17
        %v585 = vpop.permute.xlu0 %584
        %586 = vrot.lane.b32.xlu0 %v489, 17
        %v587 = vpop.permute.xlu0 %586
        %588 = vrot.lane.b32.xlu0 %v492, 17
        %v589 = vpop.permute.xlu0 %588
        %590 = vrot.lane.b32.xlu0 %v491, 17
        %v591 = vpop.permute.xlu0 %590
        %592 = vrot.lane.b32.xlu0 %v497, 17
        %v593 = vpop.permute.xlu0 %592
        %594 = vrot.lane.b32.xlu0 %v503, 17
        %v595 = vpop.permute.xlu0 %594
        %596 = vrot.lane.b32.xlu0 %v504, 17
        %v597 = vpop.permute.xlu0 %596
        %598 = vrot.lane.b32.xlu0 %v509, 17
        %v599 = vpop.permute.xlu0 %598
        %600 = vrot.lane.b32.xlu0 %v515, 17
        %v601 = vpop.permute.xlu0 %600
        %602 = vrot.lane.b32.xlu0 %v516, 17
        %v603 = vpop.permute.xlu0 %602
        %604 = vrot.lane.b32.xlu0 %v518, 17
        %v605 = vpop.permute.xlu0 %604
        %606 = vrot.lane.b32.xlu0 %v524, 17
        %v607 = vpop.permute.xlu0 %606
        %608 = vrot.lane.b32.xlu0 %v525, 17
        %v609 = vpop.permute.xlu0 %608
        %610 = vrot.lane.b32.xlu0 %v530, 17
        %v611 = vpop.permute.xlu0 %610
        %612 = vrot.lane.b32.xlu0 %v536, 17
        %v613 = vpop.permute.xlu0 %612
        %614 = vrot.lane.b32.xlu0 %v537, 17
        %v615 = vpop.permute.xlu0 %614
        %v616 = vsel %vm447, %v563, %v565
        %v617 = vsel %vm447, %v565, %v567
        %v618 = vsel %vm447, %v569, %v571
        %v619 = vsel %vm447, %v571, %v573
        %v620 = vsel %vm447, %v575, %v577
        %v621 = vsel %vm447, %v577, %v579
        %v622 = vsel %vm447, %v581, %v583
        %v623 = vsel %vm447, %v583, %v585
        %v624 = vsel %vm447, %v587, %v589
        %v625 = vsel %vm447, %v589, %v591
        %v626 = vsel %vm447, %v593, %v595
        %v627 = vsel %vm447, %v595, %v597
        %v628 = vsel %vm447, %v599, %v601
        %v629 = vsel %vm447, %v601, %v603
        %v630 = vsel %vm447, %v605, %v607
        %v631 = vsel %vm447, %v607, %v609
        %v632 = vsel %vm447, %v611, %v613
        %v633 = vsel %vm447, %v613, %v615
        %vm652 = vcmask 130048
        %v654 = vsel %vm652, %v557, 0
        %656 = vmatprep.subr.bf16.mxu0 %v617
        %657 = vmatpush1.bf16.msra.mxu0 %v616
        %658 = vmatprep.subr.bf16.mxu0 %v619
        %659 = vmatpush1.bf16.msra.mxu0 %v618
        %660 = vmatprep.subr.bf16.mxu0 %v621
        %661 = vmatpush1.bf16.msra.mxu0 %v620
        %662 = vmatprep.subr.bf16.mxu0 %v623
        %663 = vmatpush1.bf16.msra.mxu0 %v622
        %664 = vmatprep.subr.bf16.mxu0 %v625
        %665 = vmatpush1.bf16.msra.mxu0 %v624
        %666 = vmatprep.subr.bf16.mxu0 %v627
        %667 = vmatpush1.bf16.msra.mxu0 %v626
        %668 = vmatprep.subr.bf16.mxu0 %v629
        %669 = vmatpush1.bf16.msra.mxu0 %v628
        %670 = vmatprep.subr.bf16.mxu0 %v631
        %671 = vmatpush1.bf16.msra.mxu0 %v630
        %672 = vmatprep.subr.bf16.mxu0 %v633
        %673 = vmatpush1.bf16.msra.mxu0 %v632
        %674 = vmatprep.subr.bf16.mxu0 0
        %675 = vmatpush1.bf16.msra.mxu0 0
        %676 = vmatprep.subr.bf16.mxu0 0
        %677 = vmatpush1.bf16.msra.mxu0 0
        %678 = vmatprep.subr.bf16.mxu0 0
        %679 = vmatpush1.bf16.msra.mxu0 0
        %680 = vmatprep.subr.bf16.mxu0 0
        %681 = vmatpush1.bf16.msra.mxu0 0
        %682 = vmatprep.subr.bf16.mxu0 0
        %683 = vmatpush1.bf16.msra.mxu0 0
        %684 = vmatprep.subr.bf16.mxu0 0
        %685 = vmatpush1.bf16.msra.mxu0 0
        %686 = vmatprep.subr.bf16.mxu0 0
        %687 = vmatpush1.bf16.msra.mxu0 0
        %688 = vmatprep.mubr.bf16.mxu0 %v654
        %689 = vmatmul.mubr.bf16.gmra.mrb[0].mxu0 %v556
        %v690 = vpop.f32.mrb[0].mxu0
        %v691 = vadd.f32 %v543, %v690
        %v692 = vpop.f32.mrb[0].mxu0
        %v693 = vadd.f32 %v543, %v692
        %v694 = vpop.f32.mrb[0].mxu0
        %v695 = vadd.f32 %v548, %v694
        %v696 = vpop.f32.mrb[0].mxu0
        %v697 = vadd.f32 %v548, %v696
        %698 = vdwg.mxu0
        %v699 = vmax.f32 %v691, 0.0
        %v700 = vmax.f32 %v693, 0.0
        %v701 = vmax.f32 %v695, 0.0
        %v702 = vmax.f32 %v697, 0.0
        %v703 = vpack.c.bf16 %v701, %v699
        %v704 = vpack.c.bf16 %v702, %v700
        %v705 = vmul.bf16 %v703, %v372
        %v706 = vmul.bf16 %v704, %v370
        %v707 = vmul.bf16 %v703, %v400
        %v708 = vmul.bf16 %v704, %v398
        %v709 = vmul.bf16 %v703, %v412
        %v710 = vmul.bf16 %v704, %v410
        %v711 = vmul.bf16 %v703, %v420
        %v712 = vmul.bf16 %v704, %v424
        %v713 = vmul.bf16 %v703, %v432
        %v714 = vmul.bf16 %v704, %v436
        %v715 = vmul.bf16 %v703, %v444
        %v716 = vmul.bf16 %v704, %v448
        %719 = vrot.lane.b32.xlu0 %v703, 127
        %v720 = vpop.permute.xlu0 %719
        %721 = vrot.lane.b32.xlu0 %v704, 127
        %v722 = vpop.permute.xlu0 %721
        %v723 = vsel %vm411, %v457, %v720
        %v724 = vsel %vm411, %v720, %v722
        %727 = vrot.lane.b32.xlu0 %v707, 126
        %v728 = vpop.permute.xlu0 %727
        %729 = vrot.lane.b32.xlu0 %v708, 126
        %v730 = vpop.permute.xlu0 %729
        %v731 = vsel %vm473, %v468, %v728
        %v732 = vsel %vm473, %v728, %v730
        %735 = vrot.lane.b32.xlu0 %v709, 112
        %v736 = vpop.permute.xlu0 %735
        %737 = vrot.lane.b32.xlu0 %v710, 112
        %v738 = vpop.permute.xlu0 %737
        %v739 = vsel %vm485, %v480, %v736
        %v740 = vsel %vm485, %v736, %v738
        %741 = vrot.lane.b32.xlu0 %v703, 111
        %v742 = vpop.permute.xlu0 %741
        %743 = vrot.lane.b32.xlu0 %v704, 111
        %v744 = vpop.permute.xlu0 %743
        %v745 = vsel %vm371, %v742, %v744
        %748 = vrot.lane.b32.xlu0 %v711, 110
        %v749 = vpop.permute.xlu0 %748
        %750 = vrot.lane.b32.xlu0 %v712, 110
        %v751 = vpop.permute.xlu0 %750
        %v752 = vsel %vm502, %v749, %v751
        %v753 = vsel %vm502, %v751, %v501
        %756 = vrot.lane.b32.xlu0 %v713, 96
        %v757 = vpop.permute.xlu0 %756
        %758 = vrot.lane.b32.xlu0 %v714, 96
        %v759 = vpop.permute.xlu0 %758
        %v760 = vsel %vm514, %v757, %v759
        %v761 = vsel %vm514, %v759, %v513
        %762 = vrot.lane.b32.xlu0 %v703, 95
        %v763 = vpop.permute.xlu0 %762
        %764 = vrot.lane.b32.xlu0 %v704, 95
        %v765 = vpop.permute.xlu0 %764
        %v766 = vsel %vm523, %v763, %v765
        %v767 = vsel %vm523, %v765, %v522
        %770 = vrot.lane.b32.xlu0 %v715, 94
        %v771 = vpop.permute.xlu0 %770
        %772 = vrot.lane.b32.xlu0 %v716, 94
        %v773 = vpop.permute.xlu0 %772
        %v774 = vsel %vm535, %v771, %v773
        %v775 = vsel %vm535, %v773, %v534
        %v776 = vld [vmem:[#allocation5] sm:$0xff]
        %v777 = vld [vmem:[#allocation5 + $0x8] sm:$0xff]
        %778 = vset.pattern.permute.xlu0 1
        %779 = vperm.xlu0 %778, %v315
        %v780 = vpop.permute.xlu0 %779
        %782 = vset.pattern.permute.xlu0 1
        %783 = vperm.xlu0 %782, %v316
        %v784 = vpop.permute.xlu0 %783
        %v788 = vunpack.c.l.b16 %v776
        %v789 = vunpack.c.h.b16 %v776
        %v790 = vunpack.c.l.b16 %v777
        %v791 = vunpack.c.h.b16 %v777
        %v792 = vpack.c.b16 %v790, %v788
        %v793 = vpack.c.b16 %v791, %v789
        %797 = vrot.lane.b32.xlu0 %v705, 17
        %v798 = vpop.permute.xlu0 %797
        %799 = vrot.lane.b32.xlu0 %v706, 17
        %v800 = vpop.permute.xlu0 %799
        %801 = vrot.lane.b32.xlu0 %v723, 17
        %v802 = vpop.permute.xlu0 %801
        %803 = vrot.lane.b32.xlu0 %v724, 17
        %v804 = vpop.permute.xlu0 %803
        %805 = vrot.lane.b32.xlu0 %v722, 17
        %v806 = vpop.permute.xlu0 %805
        %807 = vrot.lane.b32.xlu0 %v731, 17
        %v808 = vpop.permute.xlu0 %807
        %809 = vrot.lane.b32.xlu0 %v732, 17
        %v810 = vpop.permute.xlu0 %809
        %811 = vrot.lane.b32.xlu0 %v730, 17
        %v812 = vpop.permute.xlu0 %811
        %813 = vrot.lane.b32.xlu0 %v739, 17
        %v814 = vpop.permute.xlu0 %813
        %815 = vrot.lane.b32.xlu0 %v740, 17
        %v816 = vpop.permute.xlu0 %815
        %817 = vrot.lane.b32.xlu0 %v738, 17
        %v818 = vpop.permute.xlu0 %817
        %819 = vrot.lane.b32.xlu0 %v742, 17
        %v820 = vpop.permute.xlu0 %819
        %821 = vrot.lane.b32.xlu0 %v745, 17
        %v822 = vpop.permute.xlu0 %821
        %823 = vrot.lane.b32.xlu0 %v744, 17
        %v824 = vpop.permute.xlu0 %823
        %825 = vrot.lane.b32.xlu0 %v749, 17
        %v826 = vpop.permute.xlu0 %825
        %827 = vrot.lane.b32.xlu0 %v752, 17
        %v828 = vpop.permute.xlu0 %827
        %829 = vrot.lane.b32.xlu0 %v753, 17
        %v830 = vpop.permute.xlu0 %829
        %831 = vrot.lane.b32.xlu0 %v757, 17
        %v832 = vpop.permute.xlu0 %831
        %833 = vrot.lane.b32.xlu0 %v760, 17
        %v834 = vpop.permute.xlu0 %833
        %835 = vrot.lane.b32.xlu0 %v761, 17
        %v836 = vpop.permute.xlu0 %835
        %837 = vrot.lane.b32.xlu0 %v763, 17
        %v838 = vpop.permute.xlu0 %837
        %839 = vrot.lane.b32.xlu0 %v766, 17
        %v840 = vpop.permute.xlu0 %839
        %841 = vrot.lane.b32.xlu0 %v767, 17
        %v842 = vpop.permute.xlu0 %841
        %843 = vrot.lane.b32.xlu0 %v771, 17
        %v844 = vpop.permute.xlu0 %843
        %845 = vrot.lane.b32.xlu0 %v774, 17
        %v846 = vpop.permute.xlu0 %845
        %847 = vrot.lane.b32.xlu0 %v775, 17
        %v848 = vpop.permute.xlu0 %847
        %v849 = vsel %vm447, %v563, %v798
        %v850 = vsel %vm447, %v798, %v800
        %v851 = vsel %vm447, %v802, %v804
        %v852 = vsel %vm447, %v804, %v806
        %v853 = vsel %vm447, %v808, %v810
        %v854 = vsel %vm447, %v810, %v812
        %v855 = vsel %vm447, %v814, %v816
        %v856 = vsel %vm447, %v816, %v818
        %v857 = vsel %vm447, %v820, %v822
        %v858 = vsel %vm447, %v822, %v824
        %v859 = vsel %vm447, %v826, %v828
        %v860 = vsel %vm447, %v828, %v830
        %v861 = vsel %vm447, %v832, %v834
        %v862 = vsel %vm447, %v834, %v836
        %v863 = vsel %vm447, %v838, %v840
        %v864 = vsel %vm447, %v840, %v842
        %v865 = vsel %vm447, %v844, %v846
        %v866 = vsel %vm447, %v846, %v848
        %v886 = vsel %vm652, %v793, 0
        %888 = vmatprep.subr.bf16.mxu0 %v850
        %889 = vmatpush1.bf16.msra.mxu0 %v849
        %890 = vmatprep.subr.bf16.mxu0 %v852
        %891 = vmatpush1.bf16.msra.mxu0 %v851
        %892 = vmatprep.subr.bf16.mxu0 %v854
        %893 = vmatpush1.bf16.msra.mxu0 %v853
        %894 = vmatprep.subr.bf16.mxu0 %v856
        %895 = vmatpush1.bf16.msra.mxu0 %v855
        %896 = vmatprep.subr.bf16.mxu0 %v858
        %897 = vmatpush1.bf16.msra.mxu0 %v857
        %898 = vmatprep.subr.bf16.mxu0 %v860
        %899 = vmatpush1.bf16.msra.mxu0 %v859
        %900 = vmatprep.subr.bf16.mxu0 %v862
        %901 = vmatpush1.bf16.msra.mxu0 %v861
        %902 = vmatprep.subr.bf16.mxu0 %v864
        %903 = vmatpush1.bf16.msra.mxu0 %v863
        %904 = vmatprep.subr.bf16.mxu0 %v866
        %905 = vmatpush1.bf16.msra.mxu0 %v865
        %906 = vmatprep.subr.bf16.mxu0 0
        %907 = vmatpush1.bf16.msra.mxu0 0
        %908 = vmatprep.subr.bf16.mxu0 0
        %909 = vmatpush1.bf16.msra.mxu0 0
        %910 = vmatprep.subr.bf16.mxu0 0
        %911 = vmatpush1.bf16.msra.mxu0 0
        %912 = vmatprep.subr.bf16.mxu0 0
        %913 = vmatpush1.bf16.msra.mxu0 0
        %914 = vmatprep.subr.bf16.mxu0 0
        %915 = vmatpush1.bf16.msra.mxu0 0
        %916 = vmatprep.subr.bf16.mxu0 0
        %917 = vmatpush1.bf16.msra.mxu0 0
        %918 = vmatprep.subr.bf16.mxu0 0
        %919 = vmatpush1.bf16.msra.mxu0 0
        %920 = vmatprep.mubr.bf16.mxu0 %v886
        %921 = vmatmul.mubr.bf16.gmra.mrb[0].mxu0 %v792
        %v922 = vpop.f32.mrb[0].mxu0
        %v923 = vadd.f32 %v780, %v922
        %v924 = vpop.f32.mrb[0].mxu0
        %v925 = vadd.f32 %v780, %v924
        %v926 = vpop.f32.mrb[0].mxu0
        %v927 = vadd.f32 %v784, %v926
        %v928 = vpop.f32.mrb[0].mxu0
        %v929 = vadd.f32 %v784, %v928
        %930 = vdwg.mxu0
        %v931 = vld [vmem:[%s4] sm:$0xf]
        %v932 = vld [vmem:[%s4 + $0x4] sm:$0xf]
        %933 = vset.pattern.permute.xlu0 2
        %934 = vperm.xlu0 %933, %v315
        %v935 = vpop.permute.xlu0 %934
        %937 = vset.pattern.permute.xlu0 2
        %938 = vperm.xlu0 %937, %v316
        %v939 = vpop.permute.xlu0 %938
        %v943 = vunpack.c.l.b16 %v931
        %v944 = vunpack.c.l.b16 %v932
        %v945 = vpack.c.b16 %v944, %v943
        %v947 = vsel %vm652, %v945, 0
        %949 = vmatprep.subr.bf16.mxu0 %v325
        %950 = vmatpush1.bf16.msra.mxu0 %v324
        %951 = vmatprep.subr.bf16.mxu0 0
        %952 = vmatpush1.bf16.msra.mxu0 0
        %953 = vmatprep.subr.bf16.mxu0 0
        %954 = vmatpush1.bf16.msra.mxu0 0
        %955 = vmatprep.subr.bf16.mxu0 0
        %956 = vmatpush1.bf16.msra.mxu0 0
        %957 = vmatprep.subr.bf16.mxu0 0
        %958 = vmatpush1.bf16.msra.mxu0 0
        %959 = vmatprep.subr.bf16.mxu0 0
        %960 = vmatpush1.bf16.msra.mxu0 0
        %961 = vmatprep.subr.bf16.mxu0 0
        %962 = vmatpush1.bf16.msra.mxu0 0
        %963 = vmatprep.subr.bf16.mxu0 0
        %964 = vmatpush1.bf16.msra.mxu0 0
        %965 = vmatprep.subr.bf16.mxu0 0
        %966 = vmatpush1.bf16.msra.mxu0 0
        %967 = vmatprep.subr.bf16.mxu0 0
        %968 = vmatpush1.bf16.msra.mxu0 0
        %969 = vmatprep.subr.bf16.mxu0 0
        %970 = vmatpush1.bf16.msra.mxu0 0
        %971 = vmatprep.subr.bf16.mxu0 0
        %972 = vmatpush1.bf16.msra.mxu0 0
        %973 = vmatprep.subr.bf16.mxu0 0
        %974 = vmatpush1.bf16.msra.mxu0 0
        %975 = vmatprep.subr.bf16.mxu0 0
        %976 = vmatpush1.bf16.msra.mxu0 0
        %977 = vmatprep.subr.bf16.mxu0 0
        %978 = vmatpush1.bf16.msra.mxu0 0
        %979 = vmatprep.subr.bf16.mxu0 0
        %980 = vmatpush1.bf16.msra.mxu0 0
        %981 = vmatprep.mubr.bf16.mxu0 0
        %982 = vmatmul.mubr.bf16.gmra.mrb[0].mxu0 %v947
        %v983 = vpop.f32.mrb[0].mxu0
        %v984 = vadd.f32 %v935, %v983
        %v985 = vpop.f32.mrb[0].mxu0
        %v986 = vadd.f32 %v935, %v985
        %v987 = vpop.f32.mrb[0].mxu0
        %v988 = vadd.f32 %v939, %v987
        %v989 = vpop.f32.mrb[0].mxu0
        %v990 = vadd.f32 %v939, %v989
        %991 = vdwg.mxu0
        %v992 = vadd.f32 %v984, %v923
        %v993 = vadd.f32 %v986, %v925
        %v994 = vadd.f32 %v988, %v927
        %v995 = vadd.f32 %v990, %v929
        %v996 = vmax.f32 %v992, 0.0
        %v997 = vmax.f32 %v993, 0.0
        %v998 = vmax.f32 %v994, 0.0
        %v999 = vmax.f32 %v995, 0.0
        %v1000 = vld [vmem:[%s5] sm:$0xf]
        %v1001 = vpack.c.bf16 %v998, %v996
        %v1002 = vpack.c.bf16 %v999, %v997
        %v1004 = vsel %vm652, %v1000, 0
        %1006 = vmatprep.subr.bf16.mxu0 %v1002
        %1007 = vmatpush1.bf16.msra.mxu0 %v1001
        %1008 = vmatprep.subr.bf16.mxu0 0
        %1009 = vmatpush1.bf16.msra.mxu0 0
        %1010 = vmatprep.subr.bf16.mxu0 0
        %1011 = vmatpush1.bf16.msra.mxu0 0
        %1012 = vmatprep.subr.bf16.mxu0 0
        %1013 = vmatpush1.bf16.msra.mxu0 0
        %1014 = vmatprep.subr.bf16.mxu0 0
        %1015 = vmatpush1.bf16.msra.mxu0 0
        %1016 = vmatprep.subr.bf16.mxu0 0
        %1017 = vmatpush1.bf16.msra.mxu0 0
        %1018 = vmatprep.subr.bf16.mxu0 0
        %1019 = vmatpush1.bf16.msra.mxu0 0
        %1020 = vmatprep.subr.bf16.mxu0 0
        %1021 = vmatpush1.bf16.msra.mxu0 0
        %1022 = vmatprep.subr.bf16.mxu0 0
        %1023 = vmatpush1.bf16.msra.mxu0 0
        %1024 = vmatprep.subr.bf16.mxu0 0
        %1025 = vmatpush1.bf16.msra.mxu0 0
        %1026 = vmatprep.subr.bf16.mxu0 0
        %1027 = vmatpush1.bf16.msra.mxu0 0
        %1028 = vmatprep.subr.bf16.mxu0 0
        %1029 = vmatpush1.bf16.msra.mxu0 0
        %1030 = vmatprep.subr.bf16.mxu0 0
        %1031 = vmatpush1.bf16.msra.mxu0 0
        %1032 = vmatprep.subr.bf16.mxu0 0
        %1033 = vmatpush1.bf16.msra.mxu0 0
        %1034 = vmatprep.subr.bf16.mxu0 0
        %1035 = vmatpush1.bf16.msra.mxu0 0
        %1036 = vmatprep.subr.bf16.mxu0 0
        %1037 = vmatpush1.bf16.msra.mxu0 0
        %1038 = vmatprep.mubr.bf16.mxu0 0
        %1039 = vmatmul.mubr.bf16.gmra.mrb[0].mxu0 %v1004
        %v1040 = vpop.f32.mrb[0].mxu0
        %v1041 = vadd.f32 0.0, %v1040
        %v1042 = vpop.f32.mrb[0].mxu0
        %v1043 = vadd.f32 0.0, %v1042
        %v1044 = vpop.f32.mrb[0].mxu0
        %v1045 = vpop.f32.mrb[0].mxu0
        %1046 = vdwg.mxu0
        %1047 = vst [vmem:[%s311] sm:$0xff] %v1041
        %1048 = vst [vmem:[%s311 + $0x8] sm:$0xff] %v1043
        %s1049 = sand.u32 %s185, 1
        %s1050 = scalar_lea.sflag [#allocation4], %s1049
        %s1051 = sand.u32 %s185, 1
        %s1052 = smul.addr %s1051, 16
        %s1053 = scalar_lea.vmem [#allocation7], %s1052
        // Predicated region
        $region57: #{tpu_custom_call.1} parent=47 // pred_check
          %p1054 = pneg %p195
        $region58: #{tpu_custom_call.1} parent=47 // pred_check_branch
          %1056 = sbr.rel (%p1054) target = $region60
        $region59: #{tpu_custom_call.1} parent=47 // pred_region
          %s1058 = ssub.s32 256, 256
          %1059 = vsyncadd %s1050, %s1058
          %s1060 = smul.addr %s25, 2
          %s1061 = smul.addr %s1060, 128
          %s1062 = scalar_lea.hbm %s7, %s1061
          %s1064 = sshll.u32 %s1053, 4
          %s1065 = int_to_ptr.vmem [resolvable:$true] %s1064
          %1067 = dma.vmem_to_hbm [thread:$0]  %s1065, 256, %s1062, %s1050
        $region60: #{tpu_custom_call.1} parent=47 // pred_fallthru
          _
      $region48: #{tpu_custom_call.1} parent=5 // pred_fallthru
        _
      %p1068 = scmp.le.s32.totalorder 2, %s20
      // Predicated region
      $region61: #{tpu_custom_call.1} parent=5 // pred_check
        %p1069 = pneg %p1068
      $region62: #{tpu_custom_call.1} parent=5 // pred_check_branch
        %1071 = sbr.rel (%p1069) target = $region64
      $region63: #{tpu_custom_call.1} parent=5 // pred_region
        %s1072 = ssub.s32 %s20, 2
        // Predicated region
        $region65: #{tpu_custom_call.1} parent=63 // pred_check
          %p1073 = pneg %p201
        $region66: #{tpu_custom_call.1} parent=63 // pred_check_branch
          %1075 = sbr.rel (%p1073) target = $region68
        $region67: #{tpu_custom_call.1} parent=63 // pred_region
          %s1076 = sand.u32 %s186, 1
          %s1077 = scalar_lea.sflag [#allocation4], %s1076
          %s1078 = sand.u32 %s186, 1
          %s1079 = smul.addr %s1078, 16
          %s1080 = scalar_lea.vmem [#allocation7], %s1079
          %1081 = dma.done %s1077, 256
        $region68: #{tpu_custom_call.1} parent=63 // pred_fallthru
          _
      $region64: #{tpu_custom_call.1} parent=5 // pred_fallthru
        _
    $region6: #{tpu_custom_call.1} parent=1 // loop_footer
      %s24 = sadd.s32 1, %s20
    $region7: #{tpu_custom_call.1} parent=1 // loop_footer_branch
      %19 = sbr.rel target = $region3
    $region8: #{tpu_custom_call.1} parent=1 // loop_exit
      _
    %1082 = vsyncpa [#allocation3], 1
    %s1083 = scalar_lea.sflag [#allocation3], 1
    %1084 = vsyncpa %s1083, 1
    %1085 = vsyncpa [#allocation6], 1
    %1086 = vsyncpa [#allocation4], 1
    %s1087 = scalar_lea.sflag [#allocation4], 1
    %1088 = vsyncpa %s1087, 1

</llo_original>
